<compile_context>
chip_gen: v7x
topology: tpu7x:2x2x1
jax: 0.10.0
libtpu: 0.0.40
codegen_flags: <defaults>
</compile_context>

<pallas_src>
import functools

import jax
import jax.numpy as jnp
from jax.experimental import pallas as pl
from jax.experimental.pallas import tpu as pltpu


# -----------------------------------------------------------------------------
# Fused kernel: bidirectional LSTM (both directions, all 4 sentence groups),
# mean pooling over time, and TransE L2 scores.
#
# Inputs (full-array VMEM blocks, gridless call):
#   x_ref   : (S*N, E)  time-major embedded tokens, row t*N + n  (N = 4B sequences)
#   wih_ref : (E, 8H)   concat([W_ih_fwd.T, W_ih_bwd.T], axis=1)
#   whh_ref : (H, 8H)   concat([W_hh_fwd.T, W_hh_bwd.T], axis=1)
#   b_ref   : (1, 8H)   concat([b_ih_f + b_hh_f, b_ih_b + b_hh_b])
#   pr_ref  : (B, 2H)   positive relation embeddings
#   nr_ref  : (B, 2H)   negative relation embeddings
# Outputs:
#   enc_ref : (N, 2H)   sentence encodings, rows [pos_h | pos_t | neg_h | neg_t]
#   pos_ref : (B, 1)    TransE L2 score (positive triple)
#   neg_ref : (B, 1)    TransE L2 score (negative triple)
# Scratch:
#   gx_sc   : (S*N, 8H) hoisted input-projection gates for all steps / both dirs
#   h_sc    : (2N, H)   rows 0:N fwd hidden, N:2N bwd hidden
#   c_sc    : (2N, H)   cell states, same layout
#   acc_sc  : (2N, H)   per-direction mean-pool accumulators (whole-array stores)
# -----------------------------------------------------------------------------
def bilstm_transe_kernel(x_ref, wih_ref, whh_ref, b_ref, pr_ref, nr_ref,
                         enc_ref, pos_ref, neg_ref,
                         gx_sc, h_sc, c_sc, acc_sc):
    H = whh_ref.shape[0]           # rnn hidden size
    G = 4 * H                      # gate width per direction
    N = acc_sc.shape[0] // 2       # number of sequences = 4B
    S = x_ref.shape[0] // N        # sequence length
    B = pr_ref.shape[0]

    # ---- hoisted input projection: ONE MXU matmul for all timesteps + both dirs
    gx_sc[...] = (jnp.dot(x_ref[...], wih_ref[...],
                          preferred_element_type=jnp.float32)
                  + b_ref[...])

    # ---- init recurrent state and mean-pool accumulators
    h_sc[...] = jnp.zeros_like(h_sc)
    c_sc[...] = jnp.zeros_like(c_sc)
    acc_sc[...] = jnp.zeros_like(acc_sc)

    # ---- fused forward+backward recurrence, statically unrolled over S
    for t in range(S):
        # one recurrent matmul for both directions: (2N, H) x (H, 8H)
        gh = jnp.dot(h_sc[...], whh_ref[...],
                     preferred_element_type=jnp.float32)            # (2N, 8H)
        gf = gx_sc[t * N:(t + 1) * N, 0:G] + gh[0:N, 0:G]            # fwd gates @ time t
        gb = (gx_sc[(S - 1 - t) * N:(S - t) * N, G:2 * G]
              + gh[N:2 * N, G:2 * G])                                # bwd gates @ time S-1-t
        g = jnp.concatenate([gf, gb], axis=0)                        # (2N, 4H)

        i = jax.nn.sigmoid(g[:, 0 * H:1 * H])
        f = jax.nn.sigmoid(g[:, 1 * H:2 * H])
        gg = jnp.tanh(g[:, 2 * H:3 * H])
        o = jax.nn.sigmoid(g[:, 3 * H:4 * H])

        c = f * c_sc[...] + i * gg
        h = o * jnp.tanh(c)
        h_sc[...] = h
        c_sc[...] = c
        acc_sc[...] = acc_sc[...] + h      # whole-array store, no partial-lane slices

    # ---- mean pooling + concat of the two directions -> (N, 2H)
    enc = jnp.concatenate([acc_sc[0:N, :], acc_sc[N:2 * N, :]], axis=1) * (1.0 / S)
    enc_ref[...] = enc

    # ---- fused TransE L2 score (dropout is identity in eval mode)
    ph = enc[0 * B:1 * B, :]
    pt = enc[1 * B:2 * B, :]
    nh = enc[2 * B:3 * B, :]
    nt = enc[3 * B:4 * B, :]
    dp = ph + pr_ref[...] - pt
    dn = nh + nr_ref[...] - nt
    pos_ref[...] = jnp.sum(dp * dp, axis=1, keepdims=True)
    neg_ref[...] = jnp.sum(dn * dn, axis=1, keepdims=True)


# -----------------------------------------------------------------------------
# Forward wrapper (embedding gathers are glue / plain JAX)
# -----------------------------------------------------------------------------
def transe_forward(params, pos_h, pos_t, pos_r, neg_h, neg_t, neg_r):
    word_emb = params["word_emb"]
    rel_emb = params["rel_emb"]
    wih, whh, b = params["wih_cat"], params["whh_cat"], params["b_cat"]
    H = whh.shape[0]
    E = word_emb.shape[1]
    B, S = pos_h.shape
    N = 4 * B

    # batch all four sentence groups into one effective batch of N = 4B
    ids_all = jnp.concatenate([pos_h, pos_t, neg_h, neg_t], axis=0)        # (4B, S)
    # gather directly into the time-major layout (no separate HBM transpose pass)
    x = jnp.take(word_emb, jnp.transpose(ids_all), axis=0)                 # (S, 4B, E)
    x = x.reshape(S * N, E)                                                # (S*4B, E), row t*N + n

    pr = jnp.take(rel_emb, pos_r, axis=0)                                  # (B, 2H)
    nr = jnp.take(rel_emb, neg_r, axis=0)                                  # (B, 2H)

    enc, pos, neg = pl.pallas_call(
        bilstm_transe_kernel,
        out_shape=(jax.ShapeDtypeStruct((N, 2 * H), jnp.float32),
                   jax.ShapeDtypeStruct((B, 1), jnp.float32),
                   jax.ShapeDtypeStruct((B, 1), jnp.float32)),
        scratch_shapes=[
            pltpu.VMEM((S * N, 8 * H), jnp.float32),   # hoisted input-projection gates
            pltpu.VMEM((2 * N, H), jnp.float32),       # h (fwd rows 0:N, bwd rows N:2N)
            pltpu.VMEM((2 * N, H), jnp.float32),       # c
            pltpu.VMEM((2 * N, H), jnp.float32),       # mean-pool accumulator
        ],
    )(x, wih, whh, b, pr, nr)

    pos_h_e = enc[0 * B:1 * B]
    pos_t_e = enc[1 * B:2 * B]
    neg_h_e = enc[2 * B:3 * B]
    neg_t_e = enc[3 * B:4 * B]
    return pos[:, 0], neg[:, 0], [pos_h_e, pos_t_e, pr, neg_h_e, neg_t_e, nr]


# -----------------------------------------------------------------------------
# Deterministic parameter construction (synthetic "pretrained" / init weights).
# LSTM weights are stored pre-transposed and concatenated (fwd || bwd) so the
# forward pass never transposes at call time.
# -----------------------------------------------------------------------------
def make_params(key, vocab_size, embedding_size, rnn_size, relation_total):
    H, E = rnn_size, embedding_size
    ks = jax.random.split(key, 12)

    # word_encoder weights: synthetic "pretrained" embeddings (GloVe stand-in)
    word_emb = 0.1 * jax.random.normal(ks[0], (vocab_size, E), jnp.float32)

    # relation embeddings: xavier_uniform on (relation_total, 2H), then L2 row-norm
    bound = (6.0 / (relation_total + 2 * H)) ** 0.5
    rel_w = jax.random.uniform(ks[1], (relation_total, 2 * H), jnp.float32,
                               minval=-bound, maxval=bound)
    rel_w = rel_w / jnp.sqrt(jnp.sum(rel_w * rel_w, axis=1, keepdims=True))

    # LSTM weights, PyTorch-style uniform(-1/sqrt(H), 1/sqrt(H)), gate order [i,f,g,o]
    s = 1.0 / (H ** 0.5)
    u = lambda k, shp: jax.random.uniform(k, shp, jnp.float32, minval=-s, maxval=s)
    wih_f = u(ks[2], (4 * H, E))
    whh_f = u(ks[3], (4 * H, H))
    b_f = u(ks[4], (4 * H,)) + u(ks[5], (4 * H,))     # b_ih + b_hh (fwd)
    wih_b = u(ks[6], (4 * H, E))
    whh_b = u(ks[7], (4 * H, H))
    b_b = u(ks[8], (4 * H,)) + u(ks[9], (4 * H,))     # b_ih + b_hh (bwd)

    # pre-transpose + concatenate once (kernel-friendly layout)
    wih_cat = jnp.concatenate([wih_f.T, wih_b.T], axis=1)     # (E, 8H)
    whh_cat = jnp.concatenate([whh_f.T, whh_b.T], axis=1)     # (H, 8H)
    b_cat = jnp.concatenate([b_f, b_b])[None, :]              # (1, 8H)

    return {"word_emb": word_emb, "rel_emb": rel_w,
            "wih_cat": wih_cat, "whh_cat": whh_cat, "b_cat": b_cat}


if __name__ == "__main__":
    # small config consistent with the module's hyperparameters
    B, S = 2, 8
    vocab_size = 64
    embedding_size = 32
    rnn_size = 32
    relation_total = 16

    key = jax.random.PRNGKey(0)
    kp, kd = jax.random.split(key)
    params = make_params(kp, vocab_size, embedding_size, rnn_size, relation_total)

    kds = jax.random.split(kd, 6)
    pos_h = jax.random.randint(kds[0], (B, S), 0, vocab_size, jnp.int32)
    pos_t = jax.random.randint(kds[1], (B, S), 0, vocab_size, jnp.int32)
    neg_h = jax.random.randint(kds[2], (B, S), 0, vocab_size, jnp.int32)
    neg_t = jax.random.randint(kds[3], (B, S), 0, vocab_size, jnp.int32)
    pos_r = jax.random.randint(kds[4], (B,), 0, relation_total, jnp.int32)
    neg_r = jax.random.randint(kds[5], (B,), 0, relation_total, jnp.int32)

    fwd = jax.jit(functools.partial(transe_forward, params))
    pos, neg, embs = fwd(pos_h, pos_t, pos_r, neg_h, neg_t, neg_r)
    jax.block_until_ready((pos, neg, embs))

    assert pos.shape == (B,) and neg.shape == (B,)
    assert all(e.shape == (B, 2 * rnn_size) for e in embs)
    print("KERNEL_OK")
</pallas_src>

<mosaic_0001>
module attributes {stable_mosaic.version = 11 : i64} {
  func.func @bilstm_transe_kernel(%arg0: memref<64x32xf32, #tpu.memory_space<vmem>>, %arg1: memref<32x256xf32, #tpu.memory_space<vmem>>, %arg2: memref<32x256xf32, #tpu.memory_space<vmem>>, %arg3: memref<1x256xf32, #tpu.memory_space<vmem>>, %arg4: memref<2x64xf32, #tpu.memory_space<vmem>>, %arg5: memref<2x64xf32, #tpu.memory_space<vmem>>, %arg6: memref<8x64xf32, #tpu.memory_space<vmem>>, %arg7: memref<2x1xf32, #tpu.memory_space<vmem>>, %arg8: memref<2x1xf32, #tpu.memory_space<vmem>>, %arg9: memref<64x256xf32, #tpu.memory_space<vmem>>, %arg10: memref<16x32xf32, #tpu.memory_space<vmem>>, %arg11: memref<16x32xf32, #tpu.memory_space<vmem>>, %arg12: memref<16x32xf32, #tpu.memory_space<vmem>>) attributes {dimension_semantics = [], scalar_prefetch = 0 : i64, scratch_operands = 4 : i64, tpu.core_type = #tpu.core_type<tc>} {
    %c0 = arith.constant 0 : index
    %c0_0 = arith.constant 0 : index
    %0 = vector.load %arg0[%c0, %c0_0] : memref<64x32xf32, #tpu.memory_space<vmem>>, vector<64x32xf32>
    %c0_1 = arith.constant 0 : index
    %c0_2 = arith.constant 0 : index
    %1 = vector.load %arg1[%c0_1, %c0_2] : memref<32x256xf32, #tpu.memory_space<vmem>>, vector<32x256xf32>
    %cst = arith.constant dense<0.000000e+00> : vector<64x256xf32>
    %2 = tpu.matmul %0, %1, %cst {dimension_numbers = #tpu.dot_dimension_numbers<[1], [0], [0], [1], [0, 0, 1, 1], [], []>} : vector<64x32xf32>, vector<32x256xf32>, vector<64x256xf32> -> vector<64x256xf32>
    %c0_3 = arith.constant 0 : index
    %c0_4 = arith.constant 0 : index
    %3 = vector.load %arg3[%c0_3, %c0_4] : memref<1x256xf32, #tpu.memory_space<vmem>>, vector<1x256xf32>
    %4 = vector.broadcast %3 : vector<1x256xf32> to vector<64x256xf32>
    %5 = arith.addf %2, %4 : vector<64x256xf32>
    %c0_5 = arith.constant 0 : index
    %c0_6 = arith.constant 0 : index
    %6 = vector.load %arg9[%c0_5, %c0_6] : memref<64x256xf32, #tpu.memory_space<vmem>>, vector<64x256xf32>
    tpu.vector_store %arg9[%c0_5, %c0_6], %5 {strides = array<i32>} : memref<64x256xf32, #tpu.memory_space<vmem>>, vector<64x256xf32>,
    %cst_7 = arith.constant 0.000000e+00 : f32
    %7 = vector.broadcast %cst_7 : f32 to vector<16x32xf32>
    %c0_8 = arith.constant 0 : index
    %c0_9 = arith.constant 0 : index
    %8 = vector.load %arg10[%c0_8, %c0_9] : memref<16x32xf32, #tpu.memory_space<vmem>>, vector<16x32xf32>
    tpu.vector_store %arg10[%c0_8, %c0_9], %7 {strides = array<i32>} : memref<16x32xf32, #tpu.memory_space<vmem>>, vector<16x32xf32>,
    %cst_10 = arith.constant 0.000000e+00 : f32
    %9 = vector.broadcast %cst_10 : f32 to vector<16x32xf32>
    %c0_11 = arith.constant 0 : index
    %c0_12 = arith.constant 0 : index
    %10 = vector.load %arg11[%c0_11, %c0_12] : memref<16x32xf32, #tpu.memory_space<vmem>>, vector<16x32xf32>
    tpu.vector_store %arg11[%c0_11, %c0_12], %9 {strides = array<i32>} : memref<16x32xf32, #tpu.memory_space<vmem>>, vector<16x32xf32>,
    %cst_13 = arith.constant 0.000000e+00 : f32
    %11 = vector.broadcast %cst_13 : f32 to vector<16x32xf32>
    %c0_14 = arith.constant 0 : index
    %c0_15 = arith.constant 0 : index
    %12 = vector.load %arg12[%c0_14, %c0_15] : memref<16x32xf32, #tpu.memory_space<vmem>>, vector<16x32xf32>
    tpu.vector_store %arg12[%c0_14, %c0_15], %11 {strides = array<i32>} : memref<16x32xf32, #tpu.memory_space<vmem>>, vector<16x32xf32>,
    %c0_16 = arith.constant 0 : index
    %c0_17 = arith.constant 0 : index
    %13 = vector.load %arg10[%c0_16, %c0_17] : memref<16x32xf32, #tpu.memory_space<vmem>>, vector<16x32xf32>
    %c0_18 = arith.constant 0 : index
    %c0_19 = arith.constant 0 : index
    %14 = vector.load %arg2[%c0_18, %c0_19] : memref<32x256xf32, #tpu.memory_space<vmem>>, vector<32x256xf32>
    %cst_20 = arith.constant dense<0.000000e+00> : vector<16x256xf32>
    %15 = tpu.matmul %13, %14, %cst_20 {dimension_numbers = #tpu.dot_dimension_numbers<[1], [0], [0], [1], [0, 0, 1, 1], [], []>} : vector<16x32xf32>, vector<32x256xf32>, vector<16x256xf32> -> vector<16x256xf32>
    %c0_21 = arith.constant 0 : index
    %c0_22 = arith.constant 0 : index
    %16 = vector.load %arg9[%c0_21, %c0_22] : memref<64x256xf32, #tpu.memory_space<vmem>>, vector<8x128xf32>
    %17 = vector.extract_strided_slice %15 {offsets = [0, 0], sizes = [8, 128], strides = [1, 1]} : vector<16x256xf32> to vector<8x128xf32>
    %18 = arith.addf %16, %17 : vector<8x128xf32>
    %c56 = arith.constant 56 : index
    %c128 = arith.constant 128 : index
    %19 = vector.load %arg9[%c56, %c128] : memref<64x256xf32, #tpu.memory_space<vmem>>, vector<8x128xf32>
    %20 = vector.extract_strided_slice %15 {offsets = [8, 128], sizes = [8, 128], strides = [1, 1]} : vector<16x256xf32> to vector<8x128xf32>
    %21 = arith.addf %19, %20 : vector<8x128xf32>
    %22 = tpu.concatenate %18, %21 in 0 : vector<8x128xf32>, vector<8x128xf32> -> vector<16x128xf32>
    %23 = vector.extract_strided_slice %22 {offsets = [0, 0], sizes = [16, 32], strides = [1, 1]} : vector<16x128xf32> to vector<16x32xf32>
    %24 = arith.negf %23 : vector<16x32xf32>
    %25 = math.exp %24 : vector<16x32xf32>
    %cst_23 = arith.constant 1.000000e+00 : f32
    %26 = vector.broadcast %cst_23 : f32 to vector<16x32xf32>
    %27 = arith.addf %26, %25 : vector<16x32xf32>
    %28 = arith.divf %26, %27 : vector<16x32xf32>
    %29 = vector.extract_strided_slice %22 {offsets = [0, 32], sizes = [16, 32], strides = [1, 1]} : vector<16x128xf32> to vector<16x32xf32>
    %30 = arith.negf %29 : vector<16x32xf32>
    %31 = math.exp %30 : vector<16x32xf32>
    %cst_24 = arith.constant 1.000000e+00 : f32
    %32 = vector.broadcast %cst_24 : f32 to vector<16x32xf32>
    %33 = arith.addf %32, %31 : vector<16x32xf32>
    %34 = arith.divf %32, %33 : vector<16x32xf32>
    %35 = vector.extract_strided_slice %22 {offsets = [0, 64], sizes = [16, 32], strides = [1, 1]} : vector<16x128xf32> to vector<16x32xf32>
    %36 = math.tanh %35 : vector<16x32xf32>
    %37 = vector.extract_strided_slice %22 {offsets = [0, 96], sizes = [16, 32], strides = [1, 1]} : vector<16x128xf32> to vector<16x32xf32>
    %38 = arith.negf %37 : vector<16x32xf32>
    %39 = math.exp %38 : vector<16x32xf32>
    %cst_25 = arith.constant 1.000000e+00 : f32
    %40 = vector.broadcast %cst_25 : f32 to vector<16x32xf32>
    %41 = arith.addf %40, %39 : vector<16x32xf32>
    %42 = arith.divf %40, %41 : vector<16x32xf32>
    %c0_26 = arith.constant 0 : index
    %c0_27 = arith.constant 0 : index
    %43 = vector.load %arg11[%c0_26, %c0_27] : memref<16x32xf32, #tpu.memory_space<vmem>>, vector<16x32xf32>
    %44 = arith.mulf %34, %43 : vector<16x32xf32>
    %45 = arith.mulf %28, %36 : vector<16x32xf32>
    %46 = arith.addf %44, %45 : vector<16x32xf32>
    %47 = math.tanh %46 : vector<16x32xf32>
    %48 = arith.mulf %42, %47 : vector<16x32xf32>
    %c0_28 = arith.constant 0 : index
    %c0_29 = arith.constant 0 : index
    %49 = vector.load %arg10[%c0_28, %c0_29] : memref<16x32xf32, #tpu.memory_space<vmem>>, vector<16x32xf32>
    tpu.vector_store %arg10[%c0_28, %c0_29], %48 {strides = array<i32>} : memref<16x32xf32, #tpu.memory_space<vmem>>, vector<16x32xf32>,
    %c0_30 = arith.constant 0 : index
    %c0_31 = arith.constant 0 : index
    %50 = vector.load %arg11[%c0_30, %c0_31] : memref<16x32xf32, #tpu.memory_space<vmem>>, vector<16x32xf32>
    tpu.vector_store %arg11[%c0_30, %c0_31], %46 {strides = array<i32>} : memref<16x32xf32, #tpu.memory_space<vmem>>, vector<16x32xf32>,
    %c0_32 = arith.constant 0 : index
    %c0_33 = arith.constant 0 : index
    %51 = vector.load %arg12[%c0_32, %c0_33] : memref<16x32xf32, #tpu.memory_space<vmem>>, vector<16x32xf32>
    %52 = arith.addf %51, %48 : vector<16x32xf32>
    %c0_34 = arith.constant 0 : index
    %c0_35 = arith.constant 0 : index
    %53 = vector.load %arg12[%c0_34, %c0_35] : memref<16x32xf32, #tpu.memory_space<vmem>>, vector<16x32xf32>
    tpu.vector_store %arg12[%c0_34, %c0_35], %52 {strides = array<i32>} : memref<16x32xf32, #tpu.memory_space<vmem>>, vector<16x32xf32>,
    %c0_36 = arith.constant 0 : index
    %c0_37 = arith.constant 0 : index
    %54 = vector.load %arg10[%c0_36, %c0_37] : memref<16x32xf32, #tpu.memory_space<vmem>>, vector<16x32xf32>
    %c0_38 = arith.constant 0 : index
    %c0_39 = arith.constant 0 : index
    %55 = vector.load %arg2[%c0_38, %c0_39] : memref<32x256xf32, #tpu.memory_space<vmem>>, vector<32x256xf32>
    %cst_40 = arith.constant dense<0.000000e+00> : vector<16x256xf32>
    %56 = tpu.matmul %54, %55, %cst_40 {dimension_numbers = #tpu.dot_dimension_numbers<[1], [0], [0], [1], [0, 0, 1, 1], [], []>} : vector<16x32xf32>, vector<32x256xf32>, vector<16x256xf32> -> vector<16x256xf32>
    %c8 = arith.constant 8 : index
    %c0_41 = arith.constant 0 : index
    %57 = vector.load %arg9[%c8, %c0_41] : memref<64x256xf32, #tpu.memory_space<vmem>>, vector<8x128xf32>
    %58 = vector.extract_strided_slice %56 {offsets = [0, 0], sizes = [8, 128], strides = [1, 1]} : vector<16x256xf32> to vector<8x128xf32>
    %59 = arith.addf %57, %58 : vector<8x128xf32>
    %c48 = arith.constant 48 : index
    %c128_42 = arith.constant 128 : index
    %60 = vector.load %arg9[%c48, %c128_42] : memref<64x256xf32, #tpu.memory_space<vmem>>, vector<8x128xf32>
    %61 = vector.extract_strided_slice %56 {offsets = [8, 128], sizes = [8, 128], strides = [1, 1]} : vector<16x256xf32> to vector<8x128xf32>
    %62 = arith.addf %60, %61 : vector<8x128xf32>
    %63 = tpu.concatenate %59, %62 in 0 : vector<8x128xf32>, vector<8x128xf32> -> vector<16x128xf32>
    %64 = vector.extract_strided_slice %63 {offsets = [0, 0], sizes = [16, 32], strides = [1, 1]} : vector<16x128xf32> to vector<16x32xf32>
    %65 = arith.negf %64 : vector<16x32xf32>
    %66 = math.exp %65 : vector<16x32xf32>
    %cst_43 = arith.constant 1.000000e+00 : f32
    %67 = vector.broadcast %cst_43 : f32 to vector<16x32xf32>
    %68 = arith.addf %67, %66 : vector<16x32xf32>
    %69 = arith.divf %67, %68 : vector<16x32xf32>
    %70 = vector.extract_strided_slice %63 {offsets = [0, 32], sizes = [16, 32], strides = [1, 1]} : vector<16x128xf32> to vector<16x32xf32>
    %71 = arith.negf %70 : vector<16x32xf32>
    %72 = math.exp %71 : vector<16x32xf32>
    %cst_44 = arith.constant 1.000000e+00 : f32
    %73 = vector.broadcast %cst_44 : f32 to vector<16x32xf32>
    %74 = arith.addf %73, %72 : vector<16x32xf32>
    %75 = arith.divf %73, %74 : vector<16x32xf32>
    %76 = vector.extract_strided_slice %63 {offsets = [0, 64], sizes = [16, 32], strides = [1, 1]} : vector<16x128xf32> to vector<16x32xf32>
    %77 = math.tanh %76 : vector<16x32xf32>
    %78 = vector.extract_strided_slice %63 {offsets = [0, 96], sizes = [16, 32], strides = [1, 1]} : vector<16x128xf32> to vector<16x32xf32>
    %79 = arith.negf %78 : vector<16x32xf32>
    %80 = math.exp %79 : vector<16x32xf32>
    %cst_45 = arith.constant 1.000000e+00 : f32
    %81 = vector.broadcast %cst_45 : f32 to vector<16x32xf32>
    %82 = arith.addf %81, %80 : vector<16x32xf32>
    %83 = arith.divf %81, %82 : vector<16x32xf32>
    %c0_46 = arith.constant 0 : index
    %c0_47 = arith.constant 0 : index
    %84 = vector.load %arg11[%c0_46, %c0_47] : memref<16x32xf32, #tpu.memory_space<vmem>>, vector<16x32xf32>
    %85 = arith.mulf %75, %84 : vector<16x32xf32>
    %86 = arith.mulf %69, %77 : vector<16x32xf32>
    %87 = arith.addf %85, %86 : vector<16x32xf32>
    %88 = math.tanh %87 : vector<16x32xf32>
    %89 = arith.mulf %83, %88 : vector<16x32xf32>
    %c0_48 = arith.constant 0 : index
    %c0_49 = arith.constant 0 : index
    %90 = vector.load %arg10[%c0_48, %c0_49] : memref<16x32xf32, #tpu.memory_space<vmem>>, vector<16x32xf32>
    tpu.vector_store %arg10[%c0_48, %c0_49], %89 {strides = array<i32>} : memref<16x32xf32, #tpu.memory_space<vmem>>, vector<16x32xf32>,
    %c0_50 = arith.constant 0 : index
    %c0_51 = arith.constant 0 : index
    %91 = vector.load %arg11[%c0_50, %c0_51] : memref<16x32xf32, #tpu.memory_space<vmem>>, vector<16x32xf32>
    tpu.vector_store %arg11[%c0_50, %c0_51], %87 {strides = array<i32>} : memref<16x32xf32, #tpu.memory_space<vmem>>, vector<16x32xf32>,
    %c0_52 = arith.constant 0 : index
    %c0_53 = arith.constant 0 : index
    %92 = vector.load %arg12[%c0_52, %c0_53] : memref<16x32xf32, #tpu.memory_space<vmem>>, vector<16x32xf32>
    %93 = arith.addf %92, %89 : vector<16x32xf32>
    %c0_54 = arith.constant 0 : index
    %c0_55 = arith.constant 0 : index
    %94 = vector.load %arg12[%c0_54, %c0_55] : memref<16x32xf32, #tpu.memory_space<vmem>>, vector<16x32xf32>
    tpu.vector_store %arg12[%c0_54, %c0_55], %93 {strides = array<i32>} : memref<16x32xf32, #tpu.memory_space<vmem>>, vector<16x32xf32>,
    %c0_56 = arith.constant 0 : index
    %c0_57 = arith.constant 0 : index
    %95 = vector.load %arg10[%c0_56, %c0_57] : memref<16x32xf32, #tpu.memory_space<vmem>>, vector<16x32xf32>
    %c0_58 = arith.constant 0 : index
    %c0_59 = arith.constant 0 : index
    %96 = vector.load %arg2[%c0_58, %c0_59] : memref<32x256xf32, #tpu.memory_space<vmem>>, vector<32x256xf32>
    %cst_60 = arith.constant dense<0.000000e+00> : vector<16x256xf32>
    %97 = tpu.matmul %95, %96, %cst_60 {dimension_numbers = #tpu.dot_dimension_numbers<[1], [0], [0], [1], [0, 0, 1, 1], [], []>} : vector<16x32xf32>, vector<32x256xf32>, vector<16x256xf32> -> vector<16x256xf32>
    %c16 = arith.constant 16 : index
    %c0_61 = arith.constant 0 : index
    %98 = vector.load %arg9[%c16, %c0_61] : memref<64x256xf32, #tpu.memory_space<vmem>>, vector<8x128xf32>
    %99 = vector.extract_strided_slice %97 {offsets = [0, 0], sizes = [8, 128], strides = [1, 1]} : vector<16x256xf32> to vector<8x128xf32>
    %100 = arith.addf %98, %99 : vector<8x128xf32>
    %c40 = arith.constant 40 : index
    %c128_62 = arith.constant 128 : index
    %101 = vector.load %arg9[%c40, %c128_62] : memref<64x256xf32, #tpu.memory_space<vmem>>, vector<8x128xf32>
    %102 = vector.extract_strided_slice %97 {offsets = [8, 128], sizes = [8, 128], strides = [1, 1]} : vector<16x256xf32> to vector<8x128xf32>
    %103 = arith.addf %101, %102 : vector<8x128xf32>
    %104 = tpu.concatenate %100, %103 in 0 : vector<8x128xf32>, vector<8x128xf32> -> vector<16x128xf32>
    %105 = vector.extract_strided_slice %104 {offsets = [0, 0], sizes = [16, 32], strides = [1, 1]} : vector<16x128xf32> to vector<16x32xf32>
    %106 = arith.negf %105 : vector<16x32xf32>
    %107 = math.exp %106 : vector<16x32xf32>
    %cst_63 = arith.constant 1.000000e+00 : f32
    %108 = vector.broadcast %cst_63 : f32 to vector<16x32xf32>
    %109 = arith.addf %108, %107 : vector<16x32xf32>
    %110 = arith.divf %108, %109 : vector<16x32xf32>
    %111 = vector.extract_strided_slice %104 {offsets = [0, 32], sizes = [16, 32], strides = [1, 1]} : vector<16x128xf32> to vector<16x32xf32>
    %112 = arith.negf %111 : vector<16x32xf32>
    %113 = math.exp %112 : vector<16x32xf32>
    %cst_64 = arith.constant 1.000000e+00 : f32
    %114 = vector.broadcast %cst_64 : f32 to vector<16x32xf32>
    %115 = arith.addf %114, %113 : vector<16x32xf32>
    %116 = arith.divf %114, %115 : vector<16x32xf32>
    %117 = vector.extract_strided_slice %104 {offsets = [0, 64], sizes = [16, 32], strides = [1, 1]} : vector<16x128xf32> to vector<16x32xf32>
    %118 = math.tanh %117 : vector<16x32xf32>
    %119 = vector.extract_strided_slice %104 {offsets = [0, 96], sizes = [16, 32], strides = [1, 1]} : vector<16x128xf32> to vector<16x32xf32>
    %120 = arith.negf %119 : vector<16x32xf32>
    %121 = math.exp %120 : vector<16x32xf32>
    %cst_65 = arith.constant 1.000000e+00 : f32
    %122 = vector.broadcast %cst_65 : f32 to vector<16x32xf32>
    %123 = arith.addf %122, %121 : vector<16x32xf32>
    %124 = arith.divf %122, %123 : vector<16x32xf32>
    %c0_66 = arith.constant 0 : index
    %c0_67 = arith.constant 0 : index
    %125 = vector.load %arg11[%c0_66, %c0_67] : memref<16x32xf32, #tpu.memory_space<vmem>>, vector<16x32xf32>
    %126 = arith.mulf %116, %125 : vector<16x32xf32>
    %127 = arith.mulf %110, %118 : vector<16x32xf32>
    %128 = arith.addf %126, %127 : vector<16x32xf32>
    %129 = math.tanh %128 : vector<16x32xf32>
    %130 = arith.mulf %124, %129 : vector<16x32xf32>
    %c0_68 = arith.constant 0 : index
    %c0_69 = arith.constant 0 : index
    %131 = vector.load %arg10[%c0_68, %c0_69] : memref<16x32xf32, #tpu.memory_space<vmem>>, vector<16x32xf32>
    tpu.vector_store %arg10[%c0_68, %c0_69], %130 {strides = array<i32>} : memref<16x32xf32, #tpu.memory_space<vmem>>, vector<16x32xf32>,
    %c0_70 = arith.constant 0 : index
    %c0_71 = arith.constant 0 : index
    %132 = vector.load %arg11[%c0_70, %c0_71] : memref<16x32xf32, #tpu.memory_space<vmem>>, vector<16x32xf32>
    tpu.vector_store %arg11[%c0_70, %c0_71], %128 {strides = array<i32>} : memref<16x32xf32, #tpu.memory_space<vmem>>, vector<16x32xf32>,
    %c0_72 = arith.constant 0 : index
    %c0_73 = arith.constant 0 : index
    %133 = vector.load %arg12[%c0_72, %c0_73] : memref<16x32xf32, #tpu.memory_space<vmem>>, vector<16x32xf32>
    %134 = arith.addf %133, %130 : vector<16x32xf32>
    %c0_74 = arith.constant 0 : index
    %c0_75 = arith.constant 0 : index
    %135 = vector.load %arg12[%c0_74, %c0_75] : memref<16x32xf32, #tpu.memory_space<vmem>>, vector<16x32xf32>
    tpu.vector_store %arg12[%c0_74, %c0_75], %134 {strides = array<i32>} : memref<16x32xf32, #tpu.memory_space<vmem>>, vector<16x32xf32>,
    %c0_76 = arith.constant 0 : index
    %c0_77 = arith.constant 0 : index
    %136 = vector.load %arg10[%c0_76, %c0_77] : memref<16x32xf32, #tpu.memory_space<vmem>>, vector<16x32xf32>
    %c0_78 = arith.constant 0 : index
    %c0_79 = arith.constant 0 : index
    %137 = vector.load %arg2[%c0_78, %c0_79] : memref<32x256xf32, #tpu.memory_space<vmem>>, vector<32x256xf32>
    %cst_80 = arith.constant dense<0.000000e+00> : vector<16x256xf32>
    %138 = tpu.matmul %136, %137, %cst_80 {dimension_numbers = #tpu.dot_dimension_numbers<[1], [0], [0], [1], [0, 0, 1, 1], [], []>} : vector<16x32xf32>, vector<32x256xf32>, vector<16x256xf32> -> vector<16x256xf32>
    %c24 = arith.constant 24 : index
    %c0_81 = arith.constant 0 : index
    %139 = vector.load %arg9[%c24, %c0_81] : memref<64x256xf32, #tpu.memory_space<vmem>>, vector<8x128xf32>
    %140 = vector.extract_strided_slice %138 {offsets = [0, 0], sizes = [8, 128], strides = [1, 1]} : vector<16x256xf32> to vector<8x128xf32>
    %141 = arith.addf %139, %140 : vector<8x128xf32>
    %c32 = arith.constant 32 : index
    %c128_82 = arith.constant 128 : index
    %142 = vector.load %arg9[%c32, %c128_82] : memref<64x256xf32, #tpu.memory_space<vmem>>, vector<8x128xf32>
    %143 = vector.extract_strided_slice %138 {offsets = [8, 128], sizes = [8, 128], strides = [1, 1]} : vector<16x256xf32> to vector<8x128xf32>
    %144 = arith.addf %142, %143 : vector<8x128xf32>
    %145 = tpu.concatenate %141, %144 in 0 : vector<8x128xf32>, vector<8x128xf32> -> vector<16x128xf32>
    %146 = vector.extract_strided_slice %145 {offsets = [0, 0], sizes = [16, 32], strides = [1, 1]} : vector<16x128xf32> to vector<16x32xf32>
    %147 = arith.negf %146 : vector<16x32xf32>
    %148 = math.exp %147 : vector<16x32xf32>
    %cst_83 = arith.constant 1.000000e+00 : f32
    %149 = vector.broadcast %cst_83 : f32 to vector<16x32xf32>
    %150 = arith.addf %149, %148 : vector<16x32xf32>
    %151 = arith.divf %149, %150 : vector<16x32xf32>
    %152 = vector.extract_strided_slice %145 {offsets = [0, 32], sizes = [16, 32], strides = [1, 1]} : vector<16x128xf32> to vector<16x32xf32>
    %153 = arith.negf %152 : vector<16x32xf32>
    %154 = math.exp %153 : vector<16x32xf32>
    %cst_84 = arith.constant 1.000000e+00 : f32
    %155 = vector.broadcast %cst_84 : f32 to vector<16x32xf32>
    %156 = arith.addf %155, %154 : vector<16x32xf32>
    %157 = arith.divf %155, %156 : vector<16x32xf32>
    %158 = vector.extract_strided_slice %145 {offsets = [0, 64], sizes = [16, 32], strides = [1, 1]} : vector<16x128xf32> to vector<16x32xf32>
    %159 = math.tanh %158 : vector<16x32xf32>
    %160 = vector.extract_strided_slice %145 {offsets = [0, 96], sizes = [16, 32], strides = [1, 1]} : vector<16x128xf32> to vector<16x32xf32>
    %161 = arith.negf %160 : vector<16x32xf32>
    %162 = math.exp %161 : vector<16x32xf32>
    %cst_85 = arith.constant 1.000000e+00 : f32
    %163 = vector.broadcast %cst_85 : f32 to vector<16x32xf32>
    %164 = arith.addf %163, %162 : vector<16x32xf32>
    %165 = arith.divf %163, %164 : vector<16x32xf32>
    %c0_86 = arith.constant 0 : index
    %c0_87 = arith.constant 0 : index
    %166 = vector.load %arg11[%c0_86, %c0_87] : memref<16x32xf32, #tpu.memory_space<vmem>>, vector<16x32xf32>
    %167 = arith.mulf %157, %166 : vector<16x32xf32>
    %168 = arith.mulf %151, %159 : vector<16x32xf32>
    %169 = arith.addf %167, %168 : vector<16x32xf32>
    %170 = math.tanh %169 : vector<16x32xf32>
    %171 = arith.mulf %165, %170 : vector<16x32xf32>
    %c0_88 = arith.constant 0 : index
    %c0_89 = arith.constant 0 : index
    %172 = vector.load %arg10[%c0_88, %c0_89] : memref<16x32xf32, #tpu.memory_space<vmem>>, vector<16x32xf32>
    tpu.vector_store %arg10[%c0_88, %c0_89], %171 {strides = array<i32>} : memref<16x32xf32, #tpu.memory_space<vmem>>, vector<16x32xf32>,
    %c0_90 = arith.constant 0 : index
    %c0_91 = arith.constant 0 : index
    %173 = vector.load %arg11[%c0_90, %c0_91] : memref<16x32xf32, #tpu.memory_space<vmem>>, vector<16x32xf32>
    tpu.vector_store %arg11[%c0_90, %c0_91], %169 {strides = array<i32>} : memref<16x32xf32, #tpu.memory_space<vmem>>, vector<16x32xf32>,
    %c0_92 = arith.constant 0 : index
    %c0_93 = arith.constant 0 : index
    %174 = vector.load %arg12[%c0_92, %c0_93] : memref<16x32xf32, #tpu.memory_space<vmem>>, vector<16x32xf32>
    %175 = arith.addf %174, %171 : vector<16x32xf32>
    %c0_94 = arith.constant 0 : index
    %c0_95 = arith.constant 0 : index
    %176 = vector.load %arg12[%c0_94, %c0_95] : memref<16x32xf32, #tpu.memory_space<vmem>>, vector<16x32xf32>
    tpu.vector_store %arg12[%c0_94, %c0_95], %175 {strides = array<i32>} : memref<16x32xf32, #tpu.memory_space<vmem>>, vector<16x32xf32>,
    %c0_96 = arith.constant 0 : index
    %c0_97 = arith.constant 0 : index
    %177 = vector.load %arg10[%c0_96, %c0_97] : memref<16x32xf32, #tpu.memory_space<vmem>>, vector<16x32xf32>
    %c0_98 = arith.constant 0 : index
    %c0_99 = arith.constant 0 : index
    %178 = vector.load %arg2[%c0_98, %c0_99] : memref<32x256xf32, #tpu.memory_space<vmem>>, vector<32x256xf32>
    %cst_100 = arith.constant dense<0.000000e+00> : vector<16x256xf32>
    %179 = tpu.matmul %177, %178, %cst_100 {dimension_numbers = #tpu.dot_dimension_numbers<[1], [0], [0], [1], [0, 0, 1, 1], [], []>} : vector<16x32xf32>, vector<32x256xf32>, vector<16x256xf32> -> vector<16x256xf32>
    %c32_101 = arith.constant 32 : index
    %c0_102 = arith.constant 0 : index
    %180 = vector.load %arg9[%c32_101, %c0_102] : memref<64x256xf32, #tpu.memory_space<vmem>>, vector<8x128xf32>
    %181 = vector.extract_strided_slice %179 {offsets = [0, 0], sizes = [8, 128], strides = [1, 1]} : vector<16x256xf32> to vector<8x128xf32>
    %182 = arith.addf %180, %181 : vector<8x128xf32>
    %c24_103 = arith.constant 24 : index
    %c128_104 = arith.constant 128 : index
    %183 = vector.load %arg9[%c24_103, %c128_104] : memref<64x256xf32, #tpu.memory_space<vmem>>, vector<8x128xf32>
    %184 = vector.extract_strided_slice %179 {offsets = [8, 128], sizes = [8, 128], strides = [1, 1]} : vector<16x256xf32> to vector<8x128xf32>
    %185 = arith.addf %183, %184 : vector<8x128xf32>
    %186 = tpu.concatenate %182, %185 in 0 : vector<8x128xf32>, vector<8x128xf32> -> vector<16x128xf32>
    %187 = vector.extract_strided_slice %186 {offsets = [0, 0], sizes = [16, 32], strides = [1, 1]} : vector<16x128xf32> to vector<16x32xf32>
    %188 = arith.negf %187 : vector<16x32xf32>
    %189 = math.exp %188 : vector<16x32xf32>
    %cst_105 = arith.constant 1.000000e+00 : f32
    %190 = vector.broadcast %cst_105 : f32 to vector<16x32xf32>
    %191 = arith.addf %190, %189 : vector<16x32xf32>
    %192 = arith.divf %190, %191 : vector<16x32xf32>
    %193 = vector.extract_strided_slice %186 {offsets = [0, 32], sizes = [16, 32], strides = [1, 1]} : vector<16x128xf32> to vector<16x32xf32>
    %194 = arith.negf %193 : vector<16x32xf32>
    %195 = math.exp %194 : vector<16x32xf32>
    %cst_106 = arith.constant 1.000000e+00 : f32
    %196 = vector.broadcast %cst_106 : f32 to vector<16x32xf32>
    %197 = arith.addf %196, %195 : vector<16x32xf32>
    %198 = arith.divf %196, %197 : vector<16x32xf32>
    %199 = vector.extract_strided_slice %186 {offsets = [0, 64], sizes = [16, 32], strides = [1, 1]} : vector<16x128xf32> to vector<16x32xf32>
    %200 = math.tanh %199 : vector<16x32xf32>
    %201 = vector.extract_strided_slice %186 {offsets = [0, 96], sizes = [16, 32], strides = [1, 1]} : vector<16x128xf32> to vector<16x32xf32>
    %202 = arith.negf %201 : vector<16x32xf32>
    %203 = math.exp %202 : vector<16x32xf32>
    %cst_107 = arith.constant 1.000000e+00 : f32
    %204 = vector.broadcast %cst_107 : f32 to vector<16x32xf32>
    %205 = arith.addf %204, %203 : vector<16x32xf32>
    %206 = arith.divf %204, %205 : vector<16x32xf32>
    %c0_108 = arith.constant 0 : index
    %c0_109 = arith.constant 0 : index
    %207 = vector.load %arg11[%c0_108, %c0_109] : memref<16x32xf32, #tpu.memory_space<vmem>>, vector<16x32xf32>
    %208 = arith.mulf %198, %207 : vector<16x32xf32>
    %209 = arith.mulf %192, %200 : vector<16x32xf32>
    %210 = arith.addf %208, %209 : vector<16x32xf32>
    %211 = math.tanh %210 : vector<16x32xf32>
    %212 = arith.mulf %206, %211 : vector<16x32xf32>
    %c0_110 = arith.constant 0 : index
    %c0_111 = arith.constant 0 : index
    %213 = vector.load %arg10[%c0_110, %c0_111] : memref<16x32xf32, #tpu.memory_space<vmem>>, vector<16x32xf32>
    tpu.vector_store %arg10[%c0_110, %c0_111], %212 {strides = array<i32>} : memref<16x32xf32, #tpu.memory_space<vmem>>, vector<16x32xf32>,
    %c0_112 = arith.constant 0 : index
    %c0_113 = arith.constant 0 : index
    %214 = vector.load %arg11[%c0_112, %c0_113] : memref<16x32xf32, #tpu.memory_space<vmem>>, vector<16x32xf32>
    tpu.vector_store %arg11[%c0_112, %c0_113], %210 {strides = array<i32>} : memref<16x32xf32, #tpu.memory_space<vmem>>, vector<16x32xf32>,
    %c0_114 = arith.constant 0 : index
    %c0_115 = arith.constant 0 : index
    %215 = vector.load %arg12[%c0_114, %c0_115] : memref<16x32xf32, #tpu.memory_space<vmem>>, vector<16x32xf32>
    %216 = arith.addf %215, %212 : vector<16x32xf32>
    %c0_116 = arith.constant 0 : index
    %c0_117 = arith.constant 0 : index
    %217 = vector.load %arg12[%c0_116, %c0_117] : memref<16x32xf32, #tpu.memory_space<vmem>>, vector<16x32xf32>
    tpu.vector_store %arg12[%c0_116, %c0_117], %216 {strides = array<i32>} : memref<16x32xf32, #tpu.memory_space<vmem>>, vector<16x32xf32>,
    %c0_118 = arith.constant 0 : index
    %c0_119 = arith.constant 0 : index
    %218 = vector.load %arg10[%c0_118, %c0_119] : memref<16x32xf32, #tpu.memory_space<vmem>>, vector<16x32xf32>
    %c0_120 = arith.constant 0 : index
    %c0_121 = arith.constant 0 : index
    %219 = vector.load %arg2[%c0_120, %c0_121] : memref<32x256xf32, #tpu.memory_space<vmem>>, vector<32x256xf32>
    %cst_122 = arith.constant dense<0.000000e+00> : vector<16x256xf32>
    %220 = tpu.matmul %218, %219, %cst_122 {dimension_numbers = #tpu.dot_dimension_numbers<[1], [0], [0], [1], [0, 0, 1, 1], [], []>} : vector<16x32xf32>, vector<32x256xf32>, vector<16x256xf32> -> vector<16x256xf32>
    %c40_123 = arith.constant 40 : index
    %c0_124 = arith.constant 0 : index
    %221 = vector.load %arg9[%c40_123, %c0_124] : memref<64x256xf32, #tpu.memory_space<vmem>>, vector<8x128xf32>
    %222 = vector.extract_strided_slice %220 {offsets = [0, 0], sizes = [8, 128], strides = [1, 1]} : vector<16x256xf32> to vector<8x128xf32>
    %223 = arith.addf %221, %222 : vector<8x128xf32>
    %c16_125 = arith.constant 16 : index
    %c128_126 = arith.constant 128 : index
    %224 = vector.load %arg9[%c16_125, %c128_126] : memref<64x256xf32, #tpu.memory_space<vmem>>, vector<8x128xf32>
    %225 = vector.extract_strided_slice %220 {offsets = [8, 128], sizes = [8, 128], strides = [1, 1]} : vector<16x256xf32> to vector<8x128xf32>
    %226 = arith.addf %224, %225 : vector<8x128xf32>
    %227 = tpu.concatenate %223, %226 in 0 : vector<8x128xf32>, vector<8x128xf32> -> vector<16x128xf32>
    %228 = vector.extract_strided_slice %227 {offsets = [0, 0], sizes = [16, 32], strides = [1, 1]} : vector<16x128xf32> to vector<16x32xf32>
    %229 = arith.negf %228 : vector<16x32xf32>
    %230 = math.exp %229 : vector<16x32xf32>
    %cst_127 = arith.constant 1.000000e+00 : f32
    %231 = vector.broadcast %cst_127 : f32 to vector<16x32xf32>
    %232 = arith.addf %231, %230 : vector<16x32xf32>
    %233 = arith.divf %231, %232 : vector<16x32xf32>
    %234 = vector.extract_strided_slice %227 {offsets = [0, 32], sizes = [16, 32], strides = [1, 1]} : vector<16x128xf32> to vector<16x32xf32>
    %235 = arith.negf %234 : vector<16x32xf32>
    %236 = math.exp %235 : vector<16x32xf32>
    %cst_128 = arith.constant 1.000000e+00 : f32
    %237 = vector.broadcast %cst_128 : f32 to vector<16x32xf32>
    %238 = arith.addf %237, %236 : vector<16x32xf32>
    %239 = arith.divf %237, %238 : vector<16x32xf32>
    %240 = vector.extract_strided_slice %227 {offsets = [0, 64], sizes = [16, 32], strides = [1, 1]} : vector<16x128xf32> to vector<16x32xf32>
    %241 = math.tanh %240 : vector<16x32xf32>
    %242 = vector.extract_strided_slice %227 {offsets = [0, 96], sizes = [16, 32], strides = [1, 1]} : vector<16x128xf32> to vector<16x32xf32>
    %243 = arith.negf %242 : vector<16x32xf32>
    %244 = math.exp %243 : vector<16x32xf32>
    %cst_129 = arith.constant 1.000000e+00 : f32
    %245 = vector.broadcast %cst_129 : f32 to vector<16x32xf32>
    %246 = arith.addf %245, %244 : vector<16x32xf32>
    %247 = arith.divf %245, %246 : vector<16x32xf32>
    %c0_130 = arith.constant 0 : index
    %c0_131 = arith.constant 0 : index
    %248 = vector.load %arg11[%c0_130, %c0_131] : memref<16x32xf32, #tpu.memory_space<vmem>>, vector<16x32xf32>
    %249 = arith.mulf %239, %248 : vector<16x32xf32>
    %250 = arith.mulf %233, %241 : vector<16x32xf32>
    %251 = arith.addf %249, %250 : vector<16x32xf32>
    %252 = math.tanh %251 : vector<16x32xf32>
    %253 = arith.mulf %247, %252 : vector<16x32xf32>
    %c0_132 = arith.constant 0 : index
    %c0_133 = arith.constant 0 : index
    %254 = vector.load %arg10[%c0_132, %c0_133] : memref<16x32xf32, #tpu.memory_space<vmem>>, vector<16x32xf32>
    tpu.vector_store %arg10[%c0_132, %c0_133], %253 {strides = array<i32>} : memref<16x32xf32, #tpu.memory_space<vmem>>, vector<16x32xf32>,
    %c0_134 = arith.constant 0 : index
    %c0_135 = arith.constant 0 : index
    %255 = vector.load %arg11[%c0_134, %c0_135] : memref<16x32xf32, #tpu.memory_space<vmem>>, vector<16x32xf32>
    tpu.vector_store %arg11[%c0_134, %c0_135], %251 {strides = array<i32>} : memref<16x32xf32, #tpu.memory_space<vmem>>, vector<16x32xf32>,
    %c0_136 = arith.constant 0 : index
    %c0_137 = arith.constant 0 : index
    %256 = vector.load %arg12[%c0_136, %c0_137] : memref<16x32xf32, #tpu.memory_space<vmem>>, vector<16x32xf32>
    %257 = arith.addf %256, %253 : vector<16x32xf32>
    %c0_138 = arith.constant 0 : index
    %c0_139 = arith.constant 0 : index
    %258 = vector.load %arg12[%c0_138, %c0_139] : memref<16x32xf32, #tpu.memory_space<vmem>>, vector<16x32xf32>
    tpu.vector_store %arg12[%c0_138, %c0_139], %257 {strides = array<i32>} : memref<16x32xf32, #tpu.memory_space<vmem>>, vector<16x32xf32>,
    %c0_140 = arith.constant 0 : index
    %c0_141 = arith.constant 0 : index
    %259 = vector.load %arg10[%c0_140, %c0_141] : memref<16x32xf32, #tpu.memory_space<vmem>>, vector<16x32xf32>
    %c0_142 = arith.constant 0 : index
    %c0_143 = arith.constant 0 : index
    %260 = vector.load %arg2[%c0_142, %c0_143] : memref<32x256xf32, #tpu.memory_space<vmem>>, vector<32x256xf32>
    %cst_144 = arith.constant dense<0.000000e+00> : vector<16x256xf32>
    %261 = tpu.matmul %259, %260, %cst_144 {dimension_numbers = #tpu.dot_dimension_numbers<[1], [0], [0], [1], [0, 0, 1, 1], [], []>} : vector<16x32xf32>, vector<32x256xf32>, vector<16x256xf32> -> vector<16x256xf32>
    %c48_145 = arith.constant 48 : index
    %c0_146 = arith.constant 0 : index
    %262 = vector.load %arg9[%c48_145, %c0_146] : memref<64x256xf32, #tpu.memory_space<vmem>>, vector<8x128xf32>
    %263 = vector.extract_strided_slice %261 {offsets = [0, 0], sizes = [8, 128], strides = [1, 1]} : vector<16x256xf32> to vector<8x128xf32>
    %264 = arith.addf %262, %263 : vector<8x128xf32>
    %c8_147 = arith.constant 8 : index
    %c128_148 = arith.constant 128 : index
    %265 = vector.load %arg9[%c8_147, %c128_148] : memref<64x256xf32, #tpu.memory_space<vmem>>, vector<8x128xf32>
    %266 = vector.extract_strided_slice %261 {offsets = [8, 128], sizes = [8, 128], strides = [1, 1]} : vector<16x256xf32> to vector<8x128xf32>
    %267 = arith.addf %265, %266 : vector<8x128xf32>
    %268 = tpu.concatenate %264, %267 in 0 : vector<8x128xf32>, vector<8x128xf32> -> vector<16x128xf32>
    %269 = vector.extract_strided_slice %268 {offsets = [0, 0], sizes = [16, 32], strides = [1, 1]} : vector<16x128xf32> to vector<16x32xf32>
    %270 = arith.negf %269 : vector<16x32xf32>
    %271 = math.exp %270 : vector<16x32xf32>
    %cst_149 = arith.constant 1.000000e+00 : f32
    %272 = vector.broadcast %cst_149 : f32 to vector<16x32xf32>
    %273 = arith.addf %272, %271 : vector<16x32xf32>
    %274 = arith.divf %272, %273 : vector<16x32xf32>
    %275 = vector.extract_strided_slice %268 {offsets = [0, 32], sizes = [16, 32], strides = [1, 1]} : vector<16x128xf32> to vector<16x32xf32>
    %276 = arith.negf %275 : vector<16x32xf32>
    %277 = math.exp %276 : vector<16x32xf32>
    %cst_150 = arith.constant 1.000000e+00 : f32
    %278 = vector.broadcast %cst_150 : f32 to vector<16x32xf32>
    %279 = arith.addf %278, %277 : vector<16x32xf32>
    %280 = arith.divf %278, %279 : vector<16x32xf32>
    %281 = vector.extract_strided_slice %268 {offsets = [0, 64], sizes = [16, 32], strides = [1, 1]} : vector<16x128xf32> to vector<16x32xf32>
    %282 = math.tanh %281 : vector<16x32xf32>
    %283 = vector.extract_strided_slice %268 {offsets = [0, 96], sizes = [16, 32], strides = [1, 1]} : vector<16x128xf32> to vector<16x32xf32>
    %284 = arith.negf %283 : vector<16x32xf32>
    %285 = math.exp %284 : vector<16x32xf32>
    %cst_151 = arith.constant 1.000000e+00 : f32
    %286 = vector.broadcast %cst_151 : f32 to vector<16x32xf32>
    %287 = arith.addf %286, %285 : vector<16x32xf32>
    %288 = arith.divf %286, %287 : vector<16x32xf32>
    %c0_152 = arith.constant 0 : index
    %c0_153 = arith.constant 0 : index
    %289 = vector.load %arg11[%c0_152, %c0_153] : memref<16x32xf32, #tpu.memory_space<vmem>>, vector<16x32xf32>
    %290 = arith.mulf %280, %289 : vector<16x32xf32>
    %291 = arith.mulf %274, %282 : vector<16x32xf32>
    %292 = arith.addf %290, %291 : vector<16x32xf32>
    %293 = math.tanh %292 : vector<16x32xf32>
    %294 = arith.mulf %288, %293 : vector<16x32xf32>
    %c0_154 = arith.constant 0 : index
    %c0_155 = arith.constant 0 : index
    %295 = vector.load %arg10[%c0_154, %c0_155] : memref<16x32xf32, #tpu.memory_space<vmem>>, vector<16x32xf32>
    tpu.vector_store %arg10[%c0_154, %c0_155], %294 {strides = array<i32>} : memref<16x32xf32, #tpu.memory_space<vmem>>, vector<16x32xf32>,
    %c0_156 = arith.constant 0 : index
    %c0_157 = arith.constant 0 : index
    %296 = vector.load %arg11[%c0_156, %c0_157] : memref<16x32xf32, #tpu.memory_space<vmem>>, vector<16x32xf32>
    tpu.vector_store %arg11[%c0_156, %c0_157], %292 {strides = array<i32>} : memref<16x32xf32, #tpu.memory_space<vmem>>, vector<16x32xf32>,
    %c0_158 = arith.constant 0 : index
    %c0_159 = arith.constant 0 : index
    %297 = vector.load %arg12[%c0_158, %c0_159] : memref<16x32xf32, #tpu.memory_space<vmem>>, vector<16x32xf32>
    %298 = arith.addf %297, %294 : vector<16x32xf32>
    %c0_160 = arith.constant 0 : index
    %c0_161 = arith.constant 0 : index
    %299 = vector.load %arg12[%c0_160, %c0_161] : memref<16x32xf32, #tpu.memory_space<vmem>>, vector<16x32xf32>
    tpu.vector_store %arg12[%c0_160, %c0_161], %298 {strides = array<i32>} : memref<16x32xf32, #tpu.memory_space<vmem>>, vector<16x32xf32>,
    %c0_162 = arith.constant 0 : index
    %c0_163 = arith.constant 0 : index
    %300 = vector.load %arg10[%c0_162, %c0_163] : memref<16x32xf32, #tpu.memory_space<vmem>>, vector<16x32xf32>
    %c0_164 = arith.constant 0 : index
    %c0_165 = arith.constant 0 : index
    %301 = vector.load %arg2[%c0_164, %c0_165] : memref<32x256xf32, #tpu.memory_space<vmem>>, vector<32x256xf32>
    %cst_166 = arith.constant dense<0.000000e+00> : vector<16x256xf32>
    %302 = tpu.matmul %300, %301, %cst_166 {dimension_numbers = #tpu.dot_dimension_numbers<[1], [0], [0], [1], [0, 0, 1, 1], [], []>} : vector<16x32xf32>, vector<32x256xf32>, vector<16x256xf32> -> vector<16x256xf32>
    %c56_167 = arith.constant 56 : index
    %c0_168 = arith.constant 0 : index
    %303 = vector.load %arg9[%c56_167, %c0_168] : memref<64x256xf32, #tpu.memory_space<vmem>>, vector<8x128xf32>
    %304 = vector.extract_strided_slice %302 {offsets = [0, 0], sizes = [8, 128], strides = [1, 1]} : vector<16x256xf32> to vector<8x128xf32>
    %305 = arith.addf %303, %304 : vector<8x128xf32>
    %c0_169 = arith.constant 0 : index
    %c128_170 = arith.constant 128 : index
    %306 = vector.load %arg9[%c0_169, %c128_170] : memref<64x256xf32, #tpu.memory_space<vmem>>, vector<8x128xf32>
    %307 = vector.extract_strided_slice %302 {offsets = [8, 128], sizes = [8, 128], strides = [1, 1]} : vector<16x256xf32> to vector<8x128xf32>
    %308 = arith.addf %306, %307 : vector<8x128xf32>
    %309 = tpu.concatenate %305, %308 in 0 : vector<8x128xf32>, vector<8x128xf32> -> vector<16x128xf32>
    %310 = vector.extract_strided_slice %309 {offsets = [0, 0], sizes = [16, 32], strides = [1, 1]} : vector<16x128xf32> to vector<16x32xf32>
    %311 = arith.negf %310 : vector<16x32xf32>
    %312 = math.exp %311 : vector<16x32xf32>
    %cst_171 = arith.constant 1.000000e+00 : f32
    %313 = vector.broadcast %cst_171 : f32 to vector<16x32xf32>
    %314 = arith.addf %313, %312 : vector<16x32xf32>
    %315 = arith.divf %313, %314 : vector<16x32xf32>
    %316 = vector.extract_strided_slice %309 {offsets = [0, 32], sizes = [16, 32], strides = [1, 1]} : vector<16x128xf32> to vector<16x32xf32>
    %317 = arith.negf %316 : vector<16x32xf32>
    %318 = math.exp %317 : vector<16x32xf32>
    %cst_172 = arith.constant 1.000000e+00 : f32
    %319 = vector.broadcast %cst_172 : f32 to vector<16x32xf32>
    %320 = arith.addf %319, %318 : vector<16x32xf32>
    %321 = arith.divf %319, %320 : vector<16x32xf32>
    %322 = vector.extract_strided_slice %309 {offsets = [0, 64], sizes = [16, 32], strides = [1, 1]} : vector<16x128xf32> to vector<16x32xf32>
    %323 = math.tanh %322 : vector<16x32xf32>
    %324 = vector.extract_strided_slice %309 {offsets = [0, 96], sizes = [16, 32], strides = [1, 1]} : vector<16x128xf32> to vector<16x32xf32>
    %325 = arith.negf %324 : vector<16x32xf32>
    %326 = math.exp %325 : vector<16x32xf32>
    %cst_173 = arith.constant 1.000000e+00 : f32
    %327 = vector.broadcast %cst_173 : f32 to vector<16x32xf32>
    %328 = arith.addf %327, %326 : vector<16x32xf32>
    %329 = arith.divf %327, %328 : vector<16x32xf32>
    %c0_174 = arith.constant 0 : index
    %c0_175 = arith.constant 0 : index
    %330 = vector.load %arg11[%c0_174, %c0_175] : memref<16x32xf32, #tpu.memory_space<vmem>>, vector<16x32xf32>
    %331 = arith.mulf %321, %330 : vector<16x32xf32>
    %332 = arith.mulf %315, %323 : vector<16x32xf32>
    %333 = arith.addf %331, %332 : vector<16x32xf32>
    %334 = math.tanh %333 : vector<16x32xf32>
    %335 = arith.mulf %329, %334 : vector<16x32xf32>
    %c0_176 = arith.constant 0 : index
    %c0_177 = arith.constant 0 : index
    %336 = vector.load %arg10[%c0_176, %c0_177] : memref<16x32xf32, #tpu.memory_space<vmem>>, vector<16x32xf32>
    tpu.vector_store %arg10[%c0_176, %c0_177], %335 {strides = array<i32>} : memref<16x32xf32, #tpu.memory_space<vmem>>, vector<16x32xf32>,
    %c0_178 = arith.constant 0 : index
    %c0_179 = arith.constant 0 : index
    %337 = vector.load %arg11[%c0_178, %c0_179] : memref<16x32xf32, #tpu.memory_space<vmem>>, vector<16x32xf32>
    tpu.vector_store %arg11[%c0_178, %c0_179], %333 {strides = array<i32>} : memref<16x32xf32, #tpu.memory_space<vmem>>, vector<16x32xf32>,
    %c0_180 = arith.constant 0 : index
    %c0_181 = arith.constant 0 : index
    %338 = vector.load %arg12[%c0_180, %c0_181] : memref<16x32xf32, #tpu.memory_space<vmem>>, vector<16x32xf32>
    %339 = arith.addf %338, %335 : vector<16x32xf32>
    %c0_182 = arith.constant 0 : index
    %c0_183 = arith.constant 0 : index
    %340 = vector.load %arg12[%c0_182, %c0_183] : memref<16x32xf32, #tpu.memory_space<vmem>>, vector<16x32xf32>
    tpu.vector_store %arg12[%c0_182, %c0_183], %339 {strides = array<i32>} : memref<16x32xf32, #tpu.memory_space<vmem>>, vector<16x32xf32>,
    %c0_184 = arith.constant 0 : index
    %c0_185 = arith.constant 0 : index
    %341 = vector.load %arg12[%c0_184, %c0_185] : memref<16x32xf32, #tpu.memory_space<vmem>>, vector<8x32xf32>
    %c8_186 = arith.constant 8 : index
    %c0_187 = arith.constant 0 : index
    %342 = vector.load %arg12[%c8_186, %c0_187] : memref<16x32xf32, #tpu.memory_space<vmem>>, vector<8x32xf32>
    %343 = tpu.concatenate %341, %342 in 1 : vector<8x32xf32>, vector<8x32xf32> -> vector<8x64xf32>
    %cst_188 = arith.constant 1.250000e-01 : f32
    %344 = vector.broadcast %cst_188 : f32 to vector<8x64xf32>
    %345 = arith.mulf %343, %344 : vector<8x64xf32>
    %c0_189 = arith.constant 0 : index
    %c0_190 = arith.constant 0 : index
    %346 = vector.load %arg6[%c0_189, %c0_190] : memref<8x64xf32, #tpu.memory_space<vmem>>, vector<8x64xf32>
    tpu.vector_store %arg6[%c0_189, %c0_190], %345 {strides = array<i32>} : memref<8x64xf32, #tpu.memory_space<vmem>>, vector<8x64xf32>,
    %347 = vector.extract_strided_slice %345 {offsets = [0, 0], sizes = [2, 64], strides = [1, 1]} : vector<8x64xf32> to vector<2x64xf32>
    %348 = vector.extract_strided_slice %345 {offsets = [2, 0], sizes = [2, 64], strides = [1, 1]} : vector<8x64xf32> to vector<2x64xf32>
    %349 = vector.extract_strided_slice %345 {offsets = [4, 0], sizes = [2, 64], strides = [1, 1]} : vector<8x64xf32> to vector<2x64xf32>
    %350 = vector.extract_strided_slice %345 {offsets = [6, 0], sizes = [2, 64], strides = [1, 1]} : vector<8x64xf32> to vector<2x64xf32>
    %c0_191 = arith.constant 0 : index
    %c0_192 = arith.constant 0 : index
    %351 = vector.load %arg4[%c0_191, %c0_192] : memref<2x64xf32, #tpu.memory_space<vmem>>, vector<2x64xf32>
    %352 = arith.addf %347, %351 : vector<2x64xf32>
    %353 = arith.subf %352, %348 : vector<2x64xf32>
    %c0_193 = arith.constant 0 : index
    %c0_194 = arith.constant 0 : index
    %354 = vector.load %arg5[%c0_193, %c0_194] : memref<2x64xf32, #tpu.memory_space<vmem>>, vector<2x64xf32>
    %355 = arith.addf %349, %354 : vector<2x64xf32>
    %356 = arith.subf %355, %350 : vector<2x64xf32>
    %357 = arith.mulf %353, %353 : vector<2x64xf32>
    %cst_195 = arith.constant dense<0.000000e+00> : vector<2xf32>
    %358 = vector.multi_reduction <add>, %357, %cst_195 [1] : vector<2x64xf32> to vector<2xf32>
    %359 = vector.shape_cast %358 : vector<2xf32> to vector<2x1xf32>
    %c0_196 = arith.constant 0 : index
    %c0_197 = arith.constant 0 : index
    %360 = vector.load %arg7[%c0_196, %c0_197] : memref<2x1xf32, #tpu.memory_space<vmem>>, vector<2x1xf32>
    tpu.vector_store %arg7[%c0_196, %c0_197], %359 {strides = array<i32>} : memref<2x1xf32, #tpu.memory_space<vmem>>, vector<2x1xf32>,
    %361 = arith.mulf %356, %356 : vector<2x64xf32>
    %cst_198 = arith.constant dense<0.000000e+00> : vector<2xf32>
    %362 = vector.multi_reduction <add>, %361, %cst_198 [1] : vector<2x64xf32> to vector<2xf32>
    %363 = vector.shape_cast %362 : vector<2xf32> to vector<2x1xf32>
    %c0_199 = arith.constant 0 : index
    %c0_200 = arith.constant 0 : index
    %364 = vector.load %arg8[%c0_199, %c0_200] : memref<2x1xf32, #tpu.memory_space<vmem>>, vector<2x1xf32>
    tpu.vector_store %arg8[%c0_199, %c0_200], %363 {strides = array<i32>} : memref<2x1xf32, #tpu.memory_space<vmem>>, vector<2x1xf32>,
    return
  }
}

</mosaic_0001>

<llo_original>
// kernel: transe_forward.1
$region0: #{transe_forward.1}
  #allocation0 [shape = 'u32[]', space=smem, size = 0x4, offset = 0x4, fixed_abs, tag = 'smem constant byte address 0x4 - core index']
  #allocation1 [shape = 'u32[144,128]{1,0:T(1,128)}', space=vmem, size = 0x12000, scoped, tag = 'internal scratch']
  #allocation2 [shape = 'f32[64,256]{1,0:T(8,128)}', space=vmem, size = 0x10000, scoped, tag = 'scratch operand']
  #allocation3 [shape = 'f32[16,32]{1,0:T(8,128)}', space=vmem, size = 0x2000, scoped, tag = 'scratch operand']
  #allocation4 [shape = 'f32[16,32]{1,0:T(8,128)}', space=vmem, size = 0x2000, scoped, tag = 'scratch operand']
  #allocation5 [shape = 'f32[16,32]{1,0:T(8,128)}', space=vmem, size = 0x2000, scoped, tag = 'scratch operand']
  %s0 = inlined_call_operand.vmem [shape: f32[64,32], index: 0, kind: input, shape index: {}]
  %s1 = inlined_call_operand.vmem [shape: f32[32,256], index: 1, kind: input, shape index: {}]
  %s2 = inlined_call_operand.vmem [shape: f32[32,256], index: 2, kind: input, shape index: {}]
  %s3 = inlined_call_operand.vmem [shape: f32[1,256], index: 3, kind: input, shape index: {}]
  %s4 = inlined_call_operand.vmem [shape: f32[2,64], index: 4, kind: input, shape index: {}]
  %s5 = inlined_call_operand.vmem [shape: f32[2,64], index: 5, kind: input, shape index: {}]
  %s6 = inlined_call_operand.vmem [shape: f32[8,64], index: 6, kind: output, shape index: {0}]
  %s7 = inlined_call_operand.vmem [shape: f32[2,1], index: 7, kind: output, shape index: {1}]
  %s8 = inlined_call_operand.vmem [shape: f32[2,1], index: 8, kind: output, shape index: {2}]
  %9 = xla_tuple %s6, %s7, %s8
  %s10 = sld [smem:[#allocation0]]
  $region50: #{transe_forward.1} parent=0
    _
  %s12 = ssub.s32 1, %s10
  %s13 = scalar_select 0, %s12, %s10
  // Predicated region
  $region2: #{transe_forward.1} parent=0 // pred_check
    _
  $region3: #{transe_forward.1} parent=0 // pred_check_branch
    %15 = sbr.rel (0) target = $region5
  $region4: #{transe_forward.1} parent=0 // pred_region
    _
  $region5: #{transe_forward.1} parent=0 // pred_fallthru
    _
  // Predicated region
  $region6: #{transe_forward.1} parent=0 // pred_check
    _
  $region7: #{transe_forward.1} parent=0 // pred_check_branch
    %17 = sbr.rel (0) target = $region9
  $region8: #{transe_forward.1} parent=0 // pred_region
    _
  $region9: #{transe_forward.1} parent=0 // pred_fallthru
    _
  // Predicated region
  $region10: #{transe_forward.1} parent=0 // pred_check
    _
  $region11: #{transe_forward.1} parent=0 // pred_check_branch
    %19 = sbr.rel (0) target = $region13
  $region12: #{transe_forward.1} parent=0 // pred_region
    _
  $region13: #{transe_forward.1} parent=0 // pred_fallthru
    _
  // Predicated region
  $region14: #{transe_forward.1} parent=0 // pred_check
    _
  $region15: #{transe_forward.1} parent=0 // pred_check_branch
    %21 = sbr.rel (0) target = $region17
  $region16: #{transe_forward.1} parent=0 // pred_region
    _
  $region17: #{transe_forward.1} parent=0 // pred_fallthru
    _
  // Predicated region
  $region18: #{transe_forward.1} parent=0 // pred_check
    _
  $region19: #{transe_forward.1} parent=0 // pred_check_branch
    %23 = sbr.rel (0) target = $region21
  $region20: #{transe_forward.1} parent=0 // pred_region
    _
  $region21: #{transe_forward.1} parent=0 // pred_fallthru
    _
  // Predicated region
  $region22: #{transe_forward.1} parent=0 // pred_check
    _
  $region23: #{transe_forward.1} parent=0 // pred_check_branch
    %25 = sbr.rel (0) target = $region25
  $region24: #{transe_forward.1} parent=0 // pred_region
    _
  $region25: #{transe_forward.1} parent=0 // pred_fallthru
    _
  %v26 = vld [vmem:[%s0] sm:$0xff]
  %v27 = vld [vmem:[%s0 + $0x8] sm:$0xff]
  %v28 = vld [vmem:[%s0 + $0x10] sm:$0xff]
  %v29 = vld [vmem:[%s0 + $0x18] sm:$0xff]
  %v30 = vld [vmem:[%s0 + $0x20] sm:$0xff]
  %v31 = vld [vmem:[%s0 + $0x28] sm:$0xff]
  %v32 = vld [vmem:[%s0 + $0x30] sm:$0xff]
  %v33 = vld [vmem:[%s0 + $0x38] sm:$0xff]
  %v34 = vld [vmem:[%s1] sm:$0xff]
  %v35 = vld [vmem:[%s1 + $0x8] sm:$0xff]
  %v36 = vld [vmem:[%s1 + $0x10] sm:$0xff]
  %v37 = vld [vmem:[%s1 + $0x18] sm:$0xff]
  %v38 = vld [vmem:[%s1 + $0x20] sm:$0xff]
  %v39 = vld [vmem:[%s1 + $0x28] sm:$0xff]
  %v40 = vld [vmem:[%s1 + $0x30] sm:$0xff]
  %v41 = vld [vmem:[%s1 + $0x38] sm:$0xff]
  %v42 = vld [vmem:[%s3] sm:$0x3]
  %v44 = vlaneseq
  %v45 = vshrl.u32 %v44, 7
  %v46 = vsub.s32 0, %v45
  %v47 = vrot.slane %v42, %v46
  %v48 = vlaneseq
  %v49 = vshrl.u32 %v48, 7
  %v50 = vsub.s32 1, %v49
  %v51 = vrot.slane %v42, %v50
  %vm54 = vcmask 261120
  %v56 = vsel %vm54, %v26, 0
  %v59 = vsel %vm54, %v27, 0
  %v62 = vsel %vm54, %v28, 0
  %v65 = vsel %vm54, %v29, 0
  %v68 = vsel %vm54, %v30, 0
  %v71 = vsel %vm54, %v31, 0
  %v74 = vsel %vm54, %v32, 0
  %v77 = vsel %vm54, %v33, 0
  %79 = vmatprep.subr.mxu0 %v35
  %80 = vmatpush1.msra.mxu0 %v34
  %81 = vmatprep.subr.mxu0 %v37
  %82 = vmatpush1.msra.mxu0 %v36
  %83 = vmatprep.subr.mxu0 %v39
  %84 = vmatpush1.msra.mxu0 %v38
  %85 = vmatprep.subr.mxu0 %v41
  %86 = vmatpush1.msra.mxu0 %v40
  %87 = vmatprep.subr.mxu0 0.0
  %88 = vmatpush1.msra.mxu0 0.0
  %89 = vmatprep.subr.mxu0 0.0
  %90 = vmatpush1.msra.mxu0 0.0
  %91 = vmatprep.subr.mxu0 0.0
  %92 = vmatpush1.msra.mxu0 0.0
  %93 = vmatprep.subr.mxu0 0.0
  %94 = vmatpush1.msra.mxu0 0.0
  %95 = vmatprep.subr.mxu0 0.0
  %96 = vmatpush1.msra.mxu0 0.0
  %97 = vmatprep.subr.mxu0 0.0
  %98 = vmatpush1.msra.mxu0 0.0
  %99 = vmatprep.subr.mxu0 0.0
  %100 = vmatpush1.msra.mxu0 0.0
  %101 = vmatprep.subr.mxu0 0.0
  %102 = vmatpush1.msra.mxu0 0.0
  %103 = vmatprep.subr.mxu0 0.0
  %104 = vmatpush1.msra.mxu0 0.0
  %105 = vmatprep.subr.mxu0 0.0
  %106 = vmatpush1.msra.mxu0 0.0
  %107 = vmatprep.subr.mxu0 0.0
  %108 = vmatpush1.msra.mxu0 0.0
  %109 = vmatprep.subr.mxu0 0.0
  %110 = vmatpush1.msra.mxu0 0.0
  %111 = vmatprep.subr.mxu0 0.0
  %112 = vmatpush1.msra.mxu0 0.0
  %113 = vmatprep.subr.mxu0 0.0
  %114 = vmatpush1.msra.mxu0 0.0
  %115 = vmatprep.subr.mxu0 0.0
  %116 = vmatpush1.msra.mxu0 0.0
  %117 = vmatprep.subr.mxu0 0.0
  %118 = vmatpush1.msra.mxu0 0.0
  %119 = vmatprep.subr.mxu0 0.0
  %120 = vmatpush1.msra.mxu0 0.0
  %121 = vmatprep.subr.mxu0 0.0
  %122 = vmatpush1.msra.mxu0 0.0
  %123 = vmatprep.subr.mxu0 0.0
  %124 = vmatpush1.msra.mxu0 0.0
  %125 = vmatprep.subr.mxu0 0.0
  %126 = vmatpush1.msra.mxu0 0.0
  %127 = vmatprep.subr.mxu0 0.0
  %128 = vmatpush1.msra.mxu0 0.0
  %129 = vmatprep.subr.mxu0 0.0
  %130 = vmatpush1.msra.mxu0 0.0
  %131 = vmatprep.subr.mxu0 0.0
  %132 = vmatpush1.msra.mxu0 0.0
  %133 = vmatprep.subr.mxu0 0.0
  %134 = vmatpush1.msra.mxu0 0.0
  %135 = vmatprep.subr.mxu0 0.0
  %136 = vmatpush1.msra.mxu0 0.0
  %137 = vmatprep.subr.mxu0 0.0
  %138 = vmatpush1.msra.mxu0 0.0
  %139 = vmatprep.subr.mxu0 0.0
  %140 = vmatpush1.msra.mxu0 0.0
  %141 = vmatprep.subr.mxu0 0.0
  %142 = vmatpush1.msra.mxu0 0.0
  %143 = vmatprep.mubr.f32.mxu0 0.0
  %144 = vmatmul.mubr.f32.gmra.mrb[0].mxu0 %v56
  %v145 = vpop.f32.mrb[0].mxu0
  %v146 = vadd.f32 %v47, %v145
  %v147 = vpop.f32.mrb[0].mxu0
  %v148 = vadd.f32 %v51, %v147
  %149 = vmatprep.mubr.f32.mxu0 0.0
  %150 = vmatmul.mubr.f32.gmra.mrb[0].mxu0 %v59
  %v151 = vpop.f32.mrb[0].mxu0
  %v152 = vadd.f32 %v47, %v151
  %v153 = vpop.f32.mrb[0].mxu0
  %v154 = vadd.f32 %v51, %v153
  %155 = vmatprep.mubr.f32.mxu0 0.0
  %156 = vmatmul.mubr.f32.gmra.mrb[0].mxu0 %v62
  %v157 = vpop.f32.mrb[0].mxu0
  %v158 = vadd.f32 %v47, %v157
  %v159 = vpop.f32.mrb[0].mxu0
  %v160 = vadd.f32 %v51, %v159
  %161 = vmatprep.mubr.f32.mxu0 0.0
  %162 = vmatmul.mubr.f32.gmra.mrb[0].mxu0 %v65
  %v163 = vpop.f32.mrb[0].mxu0
  %v164 = vadd.f32 %v47, %v163
  %v165 = vpop.f32.mrb[0].mxu0
  %v166 = vadd.f32 %v51, %v165
  %167 = vmatprep.mubr.f32.mxu0 0.0
  %168 = vmatmul.mubr.f32.gmra.mrb[0].mxu0 %v68
  %v169 = vpop.f32.mrb[0].mxu0
  %v170 = vadd.f32 %v47, %v169
  %v171 = vpop.f32.mrb[0].mxu0
  %v172 = vadd.f32 %v51, %v171
  %173 = vmatprep.mubr.f32.mxu0 0.0
  %174 = vmatmul.mubr.f32.gmra.mrb[0].mxu0 %v71
  %v175 = vpop.f32.mrb[0].mxu0
  %v176 = vadd.f32 %v47, %v175
  %v177 = vpop.f32.mrb[0].mxu0
  %v178 = vadd.f32 %v51, %v177
  %179 = vmatprep.mubr.f32.mxu0 0.0
  %180 = vmatmul.mubr.f32.gmra.mrb[0].mxu0 %v74
  %v181 = vpop.f32.mrb[0].mxu0
  %v182 = vadd.f32 %v47, %v181
  %v183 = vpop.f32.mrb[0].mxu0
  %v184 = vadd.f32 %v51, %v183
  %185 = vmatprep.mubr.f32.mxu0 0.0
  %186 = vmatmul.mubr.f32.gmra.mrb[0].mxu0 %v77
  %v187 = vpop.f32.mrb[0].mxu0
  %v188 = vadd.f32 %v47, %v187
  %v189 = vpop.f32.mrb[0].mxu0
  %v190 = vadd.f32 %v51, %v189
  %191 = vdwg.mxu0
  %192 = vst [vmem:[#allocation2] sm:$0xff] %v146
  %193 = vst [vmem:[#allocation2 + $0x8] sm:$0xff] %v148
  %194 = vst [vmem:[#allocation2 + $0x10] sm:$0xff] %v152
  %195 = vst [vmem:[#allocation2 + $0x18] sm:$0xff] %v154
  %196 = vst [vmem:[#allocation2 + $0x20] sm:$0xff] %v158
  %197 = vst [vmem:[#allocation2 + $0x28] sm:$0xff] %v160
  %198 = vst [vmem:[#allocation2 + $0x30] sm:$0xff] %v164
  %199 = vst [vmem:[#allocation2 + $0x38] sm:$0xff] %v166
  %200 = vst [vmem:[#allocation2 + $0x40] sm:$0xff] %v170
  %201 = vst [vmem:[#allocation2 + $0x48] sm:$0xff] %v172
  %202 = vst [vmem:[#allocation2 + $0x50] sm:$0xff] %v176
  %203 = vst [vmem:[#allocation2 + $0x58] sm:$0xff] %v178
  %204 = vst [vmem:[#allocation2 + $0x60] sm:$0xff] %v182
  %205 = vst [vmem:[#allocation2 + $0x68] sm:$0xff] %v184
  %206 = vst [vmem:[#allocation2 + $0x70] sm:$0xff] %v188
  %207 = vst [vmem:[#allocation2 + $0x78] sm:$0xff] %v190
  %208 = vst.msk [vmem:[#allocation3] sm:$0xff] %vm54, 0.0
  %209 = vst.msk [vmem:[#allocation3 + $0x8] sm:$0xff] %vm54, 0.0
  %210 = vst.msk [vmem:[#allocation4] sm:$0xff] %vm54, 0.0
  %211 = vst.msk [vmem:[#allocation4 + $0x8] sm:$0xff] %vm54, 0.0
  %212 = vst.msk [vmem:[#allocation5] sm:$0xff] %vm54, 0.0
  %213 = vst.msk [vmem:[#allocation5 + $0x8] sm:$0xff] %vm54, 0.0
  %v214 = vld [vmem:[#allocation3] sm:$0xff]
  %v215 = vld [vmem:[#allocation3 + $0x8] sm:$0xff]
  %v216 = vld [vmem:[%s2] sm:$0xff]
  %v217 = vld [vmem:[%s2 + $0x8] sm:$0xff]
  %v218 = vld [vmem:[%s2 + $0x10] sm:$0xff]
  %v219 = vld [vmem:[%s2 + $0x18] sm:$0xff]
  %v220 = vld [vmem:[%s2 + $0x20] sm:$0xff]
  %v221 = vld [vmem:[%s2 + $0x28] sm:$0xff]
  %v222 = vld [vmem:[%s2 + $0x30] sm:$0xff]
  %v223 = vld [vmem:[%s2 + $0x38] sm:$0xff]
  %v225 = vsel %vm54, %v214, 0
  %v228 = vsel %vm54, %v215, 0
  %230 = vmatprep.subr.mxu0 %v217
  %231 = vmatpush1.msra.mxu0 %v216
  %232 = vmatprep.subr.mxu0 %v219
  %233 = vmatpush1.msra.mxu0 %v218
  %234 = vmatprep.subr.mxu0 %v221
  %235 = vmatpush1.msra.mxu0 %v220
  %236 = vmatprep.subr.mxu0 %v223
  %237 = vmatpush1.msra.mxu0 %v222
  %238 = vmatprep.subr.mxu0 0.0
  %239 = vmatpush1.msra.mxu0 0.0
  %240 = vmatprep.subr.mxu0 0.0
  %241 = vmatpush1.msra.mxu0 0.0
  %242 = vmatprep.subr.mxu0 0.0
  %243 = vmatpush1.msra.mxu0 0.0
  %244 = vmatprep.subr.mxu0 0.0
  %245 = vmatpush1.msra.mxu0 0.0
  %246 = vmatprep.subr.mxu0 0.0
  %247 = vmatpush1.msra.mxu0 0.0
  %248 = vmatprep.subr.mxu0 0.0
  %249 = vmatpush1.msra.mxu0 0.0
  %250 = vmatprep.subr.mxu0 0.0
  %251 = vmatpush1.msra.mxu0 0.0
  %252 = vmatprep.subr.mxu0 0.0
  %253 = vmatpush1.msra.mxu0 0.0
  %254 = vmatprep.subr.mxu0 0.0
  %255 = vmatpush1.msra.mxu0 0.0
  %256 = vmatprep.subr.mxu0 0.0
  %257 = vmatpush1.msra.mxu0 0.0
  %258 = vmatprep.subr.mxu0 0.0
  %259 = vmatpush1.msra.mxu0 0.0
  %260 = vmatprep.subr.mxu0 0.0
  %261 = vmatpush1.msra.mxu0 0.0
  %262 = vmatprep.subr.mxu0 0.0
  %263 = vmatpush1.msra.mxu0 0.0
  %264 = vmatprep.subr.mxu0 0.0
  %265 = vmatpush1.msra.mxu0 0.0
  %266 = vmatprep.subr.mxu0 0.0
  %267 = vmatpush1.msra.mxu0 0.0
  %268 = vmatprep.subr.mxu0 0.0
  %269 = vmatpush1.msra.mxu0 0.0
  %270 = vmatprep.subr.mxu0 0.0
  %271 = vmatpush1.msra.mxu0 0.0
  %272 = vmatprep.subr.mxu0 0.0
  %273 = vmatpush1.msra.mxu0 0.0
  %274 = vmatprep.subr.mxu0 0.0
  %275 = vmatpush1.msra.mxu0 0.0
  %276 = vmatprep.subr.mxu0 0.0
  %277 = vmatpush1.msra.mxu0 0.0
  %278 = vmatprep.subr.mxu0 0.0
  %279 = vmatpush1.msra.mxu0 0.0
  %280 = vmatprep.subr.mxu0 0.0
  %281 = vmatpush1.msra.mxu0 0.0
  %282 = vmatprep.subr.mxu0 0.0
  %283 = vmatpush1.msra.mxu0 0.0
  %284 = vmatprep.subr.mxu0 0.0
  %285 = vmatpush1.msra.mxu0 0.0
  %286 = vmatprep.subr.mxu0 0.0
  %287 = vmatpush1.msra.mxu0 0.0
  %288 = vmatprep.subr.mxu0 0.0
  %289 = vmatpush1.msra.mxu0 0.0
  %290 = vmatprep.subr.mxu0 0.0
  %291 = vmatpush1.msra.mxu0 0.0
  %292 = vmatprep.subr.mxu0 0.0
  %293 = vmatpush1.msra.mxu0 0.0
  %294 = vmatprep.mubr.f32.mxu0 0.0
  %295 = vmatmul.mubr.f32.gmra.mrb[0].mxu0 %v225
  %v296 = vpop.f32.mrb[0].mxu0
  %v297 = vadd.f32 0.0, %v296
  %v298 = vpop.f32.mrb[0].mxu0
  %299 = vmatprep.mubr.f32.mxu0 0.0
  %300 = vmatmul.mubr.f32.gmra.mrb[0].mxu0 %v228
  %v301 = vpop.f32.mrb[0].mxu0
  %v302 = vpop.f32.mrb[0].mxu0
  %v303 = vadd.f32 0.0, %v302
  %304 = vdwg.mxu0
  %v305 = vld [vmem:[#allocation2] sm:$0xff]
  %v306 = vadd.f32 %v305, %v297
  %v307 = vld [vmem:[#allocation2 + $0x78] sm:$0xff]
  %v308 = vadd.f32 %v307, %v303
  %v309 = vxor.u32 %v306, 2147483648
  %v310 = vxor.u32 %v308, 2147483648
  %v311 = vmul.f32 %v309, 1.442695
  %v312 = vpow.pop %v311
  %v313 = vmul.f32 %v310, 1.442695
  %v314 = vpow.pop %v313
  %v315 = vadd.f32 %v312, 1.0
  %v316 = vadd.f32 %v314, 1.0
  %v317 = vrcp.pop %v315
  %v318 = vmul.f32 1.0, %v317
  %v319 = vrcp.pop %v316
  %v320 = vmul.f32 1.0, %v319
  %v321 = vtanh.pop %v306
  %v322 = vtanh.pop %v308
  %v323 = vld [vmem:[#allocation4] sm:$0xff]
  %v324 = vld [vmem:[#allocation4 + $0x8] sm:$0xff]
  %327 = vrot.lane.b32.xlu0 %v323, 32
  %v328 = vpop.permute.xlu0 %327
  %329 = vrot.lane.b32.xlu0 %v324, 32
  %v330 = vpop.permute.xlu0 %329
  %v333 = vmul.f32 %v318, %v328
  %v334 = vmul.f32 %v320, %v330
  %337 = vrot.lane.b32.xlu0 %v321, 64
  %v338 = vpop.permute.xlu0 %337
  %339 = vrot.lane.b32.xlu0 %v322, 64
  %v340 = vpop.permute.xlu0 %339
  %v343 = vmul.f32 %v318, %v338
  %v344 = vmul.f32 %v320, %v340
  %347 = vrot.lane.b32.xlu0 %v343, 32
  %v348 = vpop.permute.xlu0 %347
  %349 = vrot.lane.b32.xlu0 %v344, 32
  %v350 = vpop.permute.xlu0 %349
  %v353 = vadd.f32 %v333, %v348
  %v354 = vadd.f32 %v334, %v350
  %v355 = vtanh.pop %v353
  %v356 = vtanh.pop %v354
  %359 = vrot.lane.b32.xlu0 %v355, 64
  %v360 = vpop.permute.xlu0 %359
  %361 = vrot.lane.b32.xlu0 %v356, 64
  %v362 = vpop.permute.xlu0 %361
  %v365 = vmul.f32 %v318, %v360
  %v366 = vmul.f32 %v320, %v362
  %369 = vrot.lane.b32.xlu0 %v365, 32
  %v370 = vpop.permute.xlu0 %369
  %371 = vrot.lane.b32.xlu0 %v366, 32
  %v372 = vpop.permute.xlu0 %371
  %375 = vst.msk [vmem:[#allocation3] sm:$0xff] %vm54, %v370
  %376 = vst.msk [vmem:[#allocation3 + $0x8] sm:$0xff] %vm54, %v372
  %379 = vrot.lane.b32.xlu0 %v353, 96
  %v380 = vpop.permute.xlu0 %379
  %381 = vrot.lane.b32.xlu0 %v354, 96
  %v382 = vpop.permute.xlu0 %381
  %385 = vst.msk [vmem:[#allocation4] sm:$0xff] %vm54, %v380
  %386 = vst.msk [vmem:[#allocation4 + $0x8] sm:$0xff] %vm54, %v382
  %v387 = vld [vmem:[#allocation5] sm:$0xff]
  %v388 = vld [vmem:[#allocation5 + $0x8] sm:$0xff]
  %v389 = vadd.f32 %v387, %v370
  %v390 = vadd.f32 %v388, %v372
  %391 = vst.msk [vmem:[#allocation5] sm:$0xff] %vm54, %v389
  %392 = vst.msk [vmem:[#allocation5 + $0x8] sm:$0xff] %vm54, %v390
  %v393 = vld [vmem:[#allocation3] sm:$0xff]
  %v394 = vld [vmem:[#allocation3 + $0x8] sm:$0xff]
  %v395 = vld [vmem:[%s2] sm:$0xff]
  %v396 = vld [vmem:[%s2 + $0x8] sm:$0xff]
  %v397 = vld [vmem:[%s2 + $0x10] sm:$0xff]
  %v398 = vld [vmem:[%s2 + $0x18] sm:$0xff]
  %v399 = vld [vmem:[%s2 + $0x20] sm:$0xff]
  %v400 = vld [vmem:[%s2 + $0x28] sm:$0xff]
  %v401 = vld [vmem:[%s2 + $0x30] sm:$0xff]
  %v402 = vld [vmem:[%s2 + $0x38] sm:$0xff]
  %v404 = vsel %vm54, %v393, 0
  %v407 = vsel %vm54, %v394, 0
  %409 = vmatprep.subr.mxu0 %v396
  %410 = vmatpush1.msra.mxu0 %v395
  %411 = vmatprep.subr.mxu0 %v398
  %412 = vmatpush1.msra.mxu0 %v397
  %413 = vmatprep.subr.mxu0 %v400
  %414 = vmatpush1.msra.mxu0 %v399
  %415 = vmatprep.subr.mxu0 %v402
  %416 = vmatpush1.msra.mxu0 %v401
  %417 = vmatprep.subr.mxu0 0.0
  %418 = vmatpush1.msra.mxu0 0.0
  %419 = vmatprep.subr.mxu0 0.0
  %420 = vmatpush1.msra.mxu0 0.0
  %421 = vmatprep.subr.mxu0 0.0
  %422 = vmatpush1.msra.mxu0 0.0
  %423 = vmatprep.subr.mxu0 0.0
  %424 = vmatpush1.msra.mxu0 0.0
  %425 = vmatprep.subr.mxu0 0.0
  %426 = vmatpush1.msra.mxu0 0.0
  %427 = vmatprep.subr.mxu0 0.0
  %428 = vmatpush1.msra.mxu0 0.0
  %429 = vmatprep.subr.mxu0 0.0
  %430 = vmatpush1.msra.mxu0 0.0
  %431 = vmatprep.subr.mxu0 0.0
  %432 = vmatpush1.msra.mxu0 0.0
  %433 = vmatprep.subr.mxu0 0.0
  %434 = vmatpush1.msra.mxu0 0.0
  %435 = vmatprep.subr.mxu0 0.0
  %436 = vmatpush1.msra.mxu0 0.0
  %437 = vmatprep.subr.mxu0 0.0
  %438 = vmatpush1.msra.mxu0 0.0
  %439 = vmatprep.subr.mxu0 0.0
  %440 = vmatpush1.msra.mxu0 0.0
  %441 = vmatprep.subr.mxu0 0.0
  %442 = vmatpush1.msra.mxu0 0.0
  %443 = vmatprep.subr.mxu0 0.0
  %444 = vmatpush1.msra.mxu0 0.0
  %445 = vmatprep.subr.mxu0 0.0
  %446 = vmatpush1.msra.mxu0 0.0
  %447 = vmatprep.subr.mxu0 0.0
  %448 = vmatpush1.msra.mxu0 0.0
  %449 = vmatprep.subr.mxu0 0.0
  %450 = vmatpush1.msra.mxu0 0.0
  %451 = vmatprep.subr.mxu0 0.0
  %452 = vmatpush1.msra.mxu0 0.0
  %453 = vmatprep.subr.mxu0 0.0
  %454 = vmatpush1.msra.mxu0 0.0
  %455 = vmatprep.subr.mxu0 0.0
  %456 = vmatpush1.msra.mxu0 0.0
  %457 = vmatprep.subr.mxu0 0.0
  %458 = vmatpush1.msra.mxu0 0.0
  %459 = vmatprep.subr.mxu0 0.0
  %460 = vmatpush1.msra.mxu0 0.0
  %461 = vmatprep.subr.mxu0 0.0
  %462 = vmatpush1.msra.mxu0 0.0
  %463 = vmatprep.subr.mxu0 0.0
  %464 = vmatpush1.msra.mxu0 0.0
  %465 = vmatprep.subr.mxu0 0.0
  %466 = vmatpush1.msra.mxu0 0.0
  %467 = vmatprep.subr.mxu0 0.0
  %468 = vmatpush1.msra.mxu0 0.0
  %469 = vmatprep.subr.mxu0 0.0
  %470 = vmatpush1.msra.mxu0 0.0
  %471 = vmatprep.subr.mxu0 0.0
  %472 = vmatpush1.msra.mxu0 0.0
  %473 = vmatprep.mubr.f32.mxu0 0.0
  %474 = vmatmul.mubr.f32.gmra.mrb[0].mxu0 %v404
  %v475 = vpop.f32.mrb[0].mxu0
  %v476 = vadd.f32 0.0, %v475
  %v477 = vpop.f32.mrb[0].mxu0
  %478 = vmatprep.mubr.f32.mxu0 0.0
  %479 = vmatmul.mubr.f32.gmra.mrb[0].mxu0 %v407
  %v480 = vpop.f32.mrb[0].mxu0
  %v481 = vpop.f32.mrb[0].mxu0
  %v482 = vadd.f32 0.0, %v481
  %483 = vdwg.mxu0
  %v484 = vld [vmem:[#allocation2 + $0x10] sm:$0xff]
  %v485 = vadd.f32 %v484, %v476
  %v486 = vld [vmem:[#allocation2 + $0x68] sm:$0xff]
  %v487 = vadd.f32 %v486, %v482
  %v488 = vxor.u32 %v485, 2147483648
  %v489 = vxor.u32 %v487, 2147483648
  %v490 = vmul.f32 %v488, 1.442695
  %v491 = vpow.pop %v490
  %v492 = vmul.f32 %v489, 1.442695
  %v493 = vpow.pop %v492
  %v494 = vadd.f32 %v491, 1.0
  %v495 = vadd.f32 %v493, 1.0
  %v496 = vrcp.pop %v494
  %v497 = vmul.f32 1.0, %v496
  %v498 = vrcp.pop %v495
  %v499 = vmul.f32 1.0, %v498
  %v500 = vtanh.pop %v485
  %v501 = vtanh.pop %v487
  %v502 = vld [vmem:[#allocation4] sm:$0xff]
  %v503 = vld [vmem:[#allocation4 + $0x8] sm:$0xff]
  %506 = vrot.lane.b32.xlu0 %v502, 32
  %v507 = vpop.permute.xlu0 %506
  %508 = vrot.lane.b32.xlu0 %v503, 32
  %v509 = vpop.permute.xlu0 %508
  %v512 = vmul.f32 %v497, %v507
  %v513 = vmul.f32 %v499, %v509
  %516 = vrot.lane.b32.xlu0 %v500, 64
  %v517 = vpop.permute.xlu0 %516
  %518 = vrot.lane.b32.xlu0 %v501, 64
  %v519 = vpop.permute.xlu0 %518
  %v522 = vmul.f32 %v497, %v517
  %v523 = vmul.f32 %v499, %v519
  %526 = vrot.lane.b32.xlu0 %v522, 32
  %v527 = vpop.permute.xlu0 %526
  %528 = vrot.lane.b32.xlu0 %v523, 32
  %v529 = vpop.permute.xlu0 %528
  %v532 = vadd.f32 %v512, %v527
  %v533 = vadd.f32 %v513, %v529
  %v534 = vtanh.pop %v532
  %v535 = vtanh.pop %v533
  %538 = vrot.lane.b32.xlu0 %v534, 64
  %v539 = vpop.permute.xlu0 %538
  %540 = vrot.lane.b32.xlu0 %v535, 64
  %v541 = vpop.permute.xlu0 %540
  %v544 = vmul.f32 %v497, %v539
  %v545 = vmul.f32 %v499, %v541
  %548 = vrot.lane.b32.xlu0 %v544, 32
  %v549 = vpop.permute.xlu0 %548
  %550 = vrot.lane.b32.xlu0 %v545, 32
  %v551 = vpop.permute.xlu0 %550
  %554 = vst.msk [vmem:[#allocation3] sm:$0xff] %vm54, %v549
  %555 = vst.msk [vmem:[#allocation3 + $0x8] sm:$0xff] %vm54, %v551
  %558 = vrot.lane.b32.xlu0 %v532, 96
  %v559 = vpop.permute.xlu0 %558
  %560 = vrot.lane.b32.xlu0 %v533, 96
  %v561 = vpop.permute.xlu0 %560
  %564 = vst.msk [vmem:[#allocation4] sm:$0xff] %vm54, %v559
  %565 = vst.msk [vmem:[#allocation4 + $0x8] sm:$0xff] %vm54, %v561
  %v566 = vld [vmem:[#allocation5] sm:$0xff]
  %v567 = vld [vmem:[#allocation5 + $0x8] sm:$0xff]
  %v568 = vadd.f32 %v566, %v549
  %v569 = vadd.f32 %v567, %v551
  %570 = vst.msk [vmem:[#allocation5] sm:$0xff] %vm54, %v568
  %571 = vst.msk [vmem:[#allocation5 + $0x8] sm:$0xff] %vm54, %v569
  %v572 = vld [vmem:[#allocation3] sm:$0xff]
  %v573 = vld [vmem:[#allocation3 + $0x8] sm:$0xff]
  %v574 = vld [vmem:[%s2] sm:$0xff]
  %v575 = vld [vmem:[%s2 + $0x8] sm:$0xff]
  %v576 = vld [vmem:[%s2 + $0x10] sm:$0xff]
  %v577 = vld [vmem:[%s2 + $0x18] sm:$0xff]
  %v578 = vld [vmem:[%s2 + $0x20] sm:$0xff]
  %v579 = vld [vmem:[%s2 + $0x28] sm:$0xff]
  %v580 = vld [vmem:[%s2 + $0x30] sm:$0xff]
  %v581 = vld [vmem:[%s2 + $0x38] sm:$0xff]
  %v583 = vsel %vm54, %v572, 0
  %v586 = vsel %vm54, %v573, 0
  %588 = vmatprep.subr.mxu0 %v575
  %589 = vmatpush1.msra.mxu0 %v574
  %590 = vmatprep.subr.mxu0 %v577
  %591 = vmatpush1.msra.mxu0 %v576
  %592 = vmatprep.subr.mxu0 %v579
  %593 = vmatpush1.msra.mxu0 %v578
  %594 = vmatprep.subr.mxu0 %v581
  %595 = vmatpush1.msra.mxu0 %v580
  %596 = vmatprep.subr.mxu0 0.0
  %597 = vmatpush1.msra.mxu0 0.0
  %598 = vmatprep.subr.mxu0 0.0
  %599 = vmatpush1.msra.mxu0 0.0
  %600 = vmatprep.subr.mxu0 0.0
  %601 = vmatpush1.msra.mxu0 0.0
  %602 = vmatprep.subr.mxu0 0.0
  %603 = vmatpush1.msra.mxu0 0.0
  %604 = vmatprep.subr.mxu0 0.0
  %605 = vmatpush1.msra.mxu0 0.0
  %606 = vmatprep.subr.mxu0 0.0
  %607 = vmatpush1.msra.mxu0 0.0
  %608 = vmatprep.subr.mxu0 0.0
  %609 = vmatpush1.msra.mxu0 0.0
  %610 = vmatprep.subr.mxu0 0.0
  %611 = vmatpush1.msra.mxu0 0.0
  %612 = vmatprep.subr.mxu0 0.0
  %613 = vmatpush1.msra.mxu0 0.0
  %614 = vmatprep.subr.mxu0 0.0
  %615 = vmatpush1.msra.mxu0 0.0
  %616 = vmatprep.subr.mxu0 0.0
  %617 = vmatpush1.msra.mxu0 0.0
  %618 = vmatprep.subr.mxu0 0.0
  %619 = vmatpush1.msra.mxu0 0.0
  %620 = vmatprep.subr.mxu0 0.0
  %621 = vmatpush1.msra.mxu0 0.0
  %622 = vmatprep.subr.mxu0 0.0
  %623 = vmatpush1.msra.mxu0 0.0
  %624 = vmatprep.subr.mxu0 0.0
  %625 = vmatpush1.msra.mxu0 0.0
  %626 = vmatprep.subr.mxu0 0.0
  %627 = vmatpush1.msra.mxu0 0.0
  %628 = vmatprep.subr.mxu0 0.0
  %629 = vmatpush1.msra.mxu0 0.0
  %630 = vmatprep.subr.mxu0 0.0
  %631 = vmatpush1.msra.mxu0 0.0
  %632 = vmatprep.subr.mxu0 0.0
  %633 = vmatpush1.msra.mxu0 0.0
  %634 = vmatprep.subr.mxu0 0.0
  %635 = vmatpush1.msra.mxu0 0.0
  %636 = vmatprep.subr.mxu0 0.0
  %637 = vmatpush1.msra.mxu0 0.0
  %638 = vmatprep.subr.mxu0 0.0
  %639 = vmatpush1.msra.mxu0 0.0
  %640 = vmatprep.subr.mxu0 0.0
  %641 = vmatpush1.msra.mxu0 0.0
  %642 = vmatprep.subr.mxu0 0.0
  %643 = vmatpush1.msra.mxu0 0.0
  %644 = vmatprep.subr.mxu0 0.0
  %645 = vmatpush1.msra.mxu0 0.0
  %646 = vmatprep.subr.mxu0 0.0
  %647 = vmatpush1.msra.mxu0 0.0
  %648 = vmatprep.subr.mxu0 0.0
  %649 = vmatpush1.msra.mxu0 0.0
  %650 = vmatprep.subr.mxu0 0.0
  %651 = vmatpush1.msra.mxu0 0.0
  %652 = vmatprep.mubr.f32.mxu0 0.0
  %653 = vmatmul.mubr.f32.gmra.mrb[0].mxu0 %v583
  %v654 = vpop.f32.mrb[0].mxu0
  %v655 = vadd.f32 0.0, %v654
  %v656 = vpop.f32.mrb[0].mxu0
  %657 = vmatprep.mubr.f32.mxu0 0.0
  %658 = vmatmul.mubr.f32.gmra.mrb[0].mxu0 %v586
  %v659 = vpop.f32.mrb[0].mxu0
  %v660 = vpop.f32.mrb[0].mxu0
  %v661 = vadd.f32 0.0, %v660
  %662 = vdwg.mxu0
  %v663 = vld [vmem:[#allocation2 + $0x20] sm:$0xff]
  %v664 = vadd.f32 %v663, %v655
  %v665 = vld [vmem:[#allocation2 + $0x58] sm:$0xff]
  %v666 = vadd.f32 %v665, %v661
  %v667 = vxor.u32 %v664, 2147483648
  %v668 = vxor.u32 %v666, 2147483648
  %v669 = vmul.f32 %v667, 1.442695
  %v670 = vpow.pop %v669
  %v671 = vmul.f32 %v668, 1.442695
  %v672 = vpow.pop %v671
  %v673 = vadd.f32 %v670, 1.0
  %v674 = vadd.f32 %v672, 1.0
  %v675 = vrcp.pop %v673
  %v676 = vmul.f32 1.0, %v675
  %v677 = vrcp.pop %v674
  %v678 = vmul.f32 1.0, %v677
  %v679 = vtanh.pop %v664
  %v680 = vtanh.pop %v666
  %v681 = vld [vmem:[#allocation4] sm:$0xff]
  %v682 = vld [vmem:[#allocation4 + $0x8] sm:$0xff]
  %685 = vrot.lane.b32.xlu0 %v681, 32
  %v686 = vpop.permute.xlu0 %685
  %687 = vrot.lane.b32.xlu0 %v682, 32
  %v688 = vpop.permute.xlu0 %687
  %v691 = vmul.f32 %v676, %v686
  %v692 = vmul.f32 %v678, %v688
  %695 = vrot.lane.b32.xlu0 %v679, 64
  %v696 = vpop.permute.xlu0 %695
  %697 = vrot.lane.b32.xlu0 %v680, 64
  %v698 = vpop.permute.xlu0 %697
  %v701 = vmul.f32 %v676, %v696
  %v702 = vmul.f32 %v678, %v698
  %705 = vrot.lane.b32.xlu0 %v701, 32
  %v706 = vpop.permute.xlu0 %705
  %707 = vrot.lane.b32.xlu0 %v702, 32
  %v708 = vpop.permute.xlu0 %707
  %v711 = vadd.f32 %v691, %v706
  %v712 = vadd.f32 %v692, %v708
  %v713 = vtanh.pop %v711
  %v714 = vtanh.pop %v712
  %717 = vrot.lane.b32.xlu0 %v713, 64
  %v718 = vpop.permute.xlu0 %717
  %719 = vrot.lane.b32.xlu0 %v714, 64
  %v720 = vpop.permute.xlu0 %719
  %v723 = vmul.f32 %v676, %v718
  %v724 = vmul.f32 %v678, %v720
  %727 = vrot.lane.b32.xlu0 %v723, 32
  %v728 = vpop.permute.xlu0 %727
  %729 = vrot.lane.b32.xlu0 %v724, 32
  %v730 = vpop.permute.xlu0 %729
  %733 = vst.msk [vmem:[#allocation3] sm:$0xff] %vm54, %v728
  %734 = vst.msk [vmem:[#allocation3 + $0x8] sm:$0xff] %vm54, %v730
  %737 = vrot.lane.b32.xlu0 %v711, 96
  %v738 = vpop.permute.xlu0 %737
  %739 = vrot.lane.b32.xlu0 %v712, 96
  %v740 = vpop.permute.xlu0 %739
  %743 = vst.msk [vmem:[#allocation4] sm:$0xff] %vm54, %v738
  %744 = vst.msk [vmem:[#allocation4 + $0x8] sm:$0xff] %vm54, %v740
  %v745 = vld [vmem:[#allocation5] sm:$0xff]
  %v746 = vld [vmem:[#allocation5 + $0x8] sm:$0xff]
  %v747 = vadd.f32 %v745, %v728
  %v748 = vadd.f32 %v746, %v730
  %749 = vst.msk [vmem:[#allocation5] sm:$0xff] %vm54, %v747
  %750 = vst.msk [vmem:[#allocation5 + $0x8] sm:$0xff] %vm54, %v748
  %v751 = vld [vmem:[#allocation3] sm:$0xff]
  %v752 = vld [vmem:[#allocation3 + $0x8] sm:$0xff]
  %v753 = vld [vmem:[%s2] sm:$0xff]
  %v754 = vld [vmem:[%s2 + $0x8] sm:$0xff]
  %v755 = vld [vmem:[%s2 + $0x10] sm:$0xff]
  %v756 = vld [vmem:[%s2 + $0x18] sm:$0xff]
  %v757 = vld [vmem:[%s2 + $0x20] sm:$0xff]
  %v758 = vld [vmem:[%s2 + $0x28] sm:$0xff]
  %v759 = vld [vmem:[%s2 + $0x30] sm:$0xff]
  %v760 = vld [vmem:[%s2 + $0x38] sm:$0xff]
  %v762 = vsel %vm54, %v751, 0
  %v765 = vsel %vm54, %v752, 0
  %767 = vmatprep.subr.mxu0 %v754
  %768 = vmatpush1.msra.mxu0 %v753
  %769 = vmatprep.subr.mxu0 %v756
  %770 = vmatpush1.msra.mxu0 %v755
  %771 = vmatprep.subr.mxu0 %v758
  %772 = vmatpush1.msra.mxu0 %v757
  %773 = vmatprep.subr.mxu0 %v760
  %774 = vmatpush1.msra.mxu0 %v759
  %775 = vmatprep.subr.mxu0 0.0
  %776 = vmatpush1.msra.mxu0 0.0
  %777 = vmatprep.subr.mxu0 0.0
  %778 = vmatpush1.msra.mxu0 0.0
  %779 = vmatprep.subr.mxu0 0.0
  %780 = vmatpush1.msra.mxu0 0.0
  %781 = vmatprep.subr.mxu0 0.0
  %782 = vmatpush1.msra.mxu0 0.0
  %783 = vmatprep.subr.mxu0 0.0
  %784 = vmatpush1.msra.mxu0 0.0
  %785 = vmatprep.subr.mxu0 0.0
  %786 = vmatpush1.msra.mxu0 0.0
  %787 = vmatprep.subr.mxu0 0.0
  %788 = vmatpush1.msra.mxu0 0.0
  %789 = vmatprep.subr.mxu0 0.0
  %790 = vmatpush1.msra.mxu0 0.0
  %791 = vmatprep.subr.mxu0 0.0
  %792 = vmatpush1.msra.mxu0 0.0
  %793 = vmatprep.subr.mxu0 0.0
  %794 = vmatpush1.msra.mxu0 0.0
  %795 = vmatprep.subr.mxu0 0.0
  %796 = vmatpush1.msra.mxu0 0.0
  %797 = vmatprep.subr.mxu0 0.0
  %798 = vmatpush1.msra.mxu0 0.0
  %799 = vmatprep.subr.mxu0 0.0
  %800 = vmatpush1.msra.mxu0 0.0
  %801 = vmatprep.subr.mxu0 0.0
  %802 = vmatpush1.msra.mxu0 0.0
  %803 = vmatprep.subr.mxu0 0.0
  %804 = vmatpush1.msra.mxu0 0.0
  %805 = vmatprep.subr.mxu0 0.0
  %806 = vmatpush1.msra.mxu0 0.0
  %807 = vmatprep.subr.mxu0 0.0
  %808 = vmatpush1.msra.mxu0 0.0
  %809 = vmatprep.subr.mxu0 0.0
  %810 = vmatpush1.msra.mxu0 0.0
  %811 = vmatprep.subr.mxu0 0.0
  %812 = vmatpush1.msra.mxu0 0.0
  %813 = vmatprep.subr.mxu0 0.0
  %814 = vmatpush1.msra.mxu0 0.0
  %815 = vmatprep.subr.mxu0 0.0
  %816 = vmatpush1.msra.mxu0 0.0
  %817 = vmatprep.subr.mxu0 0.0
  %818 = vmatpush1.msra.mxu0 0.0
  %819 = vmatprep.subr.mxu0 0.0
  %820 = vmatpush1.msra.mxu0 0.0
  %821 = vmatprep.subr.mxu0 0.0
  %822 = vmatpush1.msra.mxu0 0.0
  %823 = vmatprep.subr.mxu0 0.0
  %824 = vmatpush1.msra.mxu0 0.0
  %825 = vmatprep.subr.mxu0 0.0
  %826 = vmatpush1.msra.mxu0 0.0
  %827 = vmatprep.subr.mxu0 0.0
  %828 = vmatpush1.msra.mxu0 0.0
  %829 = vmatprep.subr.mxu0 0.0
  %830 = vmatpush1.msra.mxu0 0.0
  %831 = vmatprep.mubr.f32.mxu0 0.0
  %832 = vmatmul.mubr.f32.gmra.mrb[0].mxu0 %v762
  %v833 = vpop.f32.mrb[0].mxu0
  %v834 = vadd.f32 0.0, %v833
  %v835 = vpop.f32.mrb[0].mxu0
  %836 = vmatprep.mubr.f32.mxu0 0.0
  %837 = vmatmul.mubr.f32.gmra.mrb[0].mxu0 %v765
  %v838 = vpop.f32.mrb[0].mxu0
  %v839 = vpop.f32.mrb[0].mxu0
  %v840 = vadd.f32 0.0, %v839
  %841 = vdwg.mxu0
  %v842 = vld [vmem:[#allocation2 + $0x30] sm:$0xff]
  %v843 = vadd.f32 %v842, %v834
  %v844 = vld [vmem:[#allocation2 + $0x48] sm:$0xff]
  %v845 = vadd.f32 %v844, %v840
  %v846 = vxor.u32 %v843, 2147483648
  %v847 = vxor.u32 %v845, 2147483648
  %v848 = vmul.f32 %v846, 1.442695
  %v849 = vpow.pop %v848
  %v850 = vmul.f32 %v847, 1.442695
  %v851 = vpow.pop %v850
  %v852 = vadd.f32 %v849, 1.0
  %v853 = vadd.f32 %v851, 1.0
  %v854 = vrcp.pop %v852
  %v855 = vmul.f32 1.0, %v854
  %v856 = vrcp.pop %v853
  %v857 = vmul.f32 1.0, %v856
  %v858 = vtanh.pop %v843
  %v859 = vtanh.pop %v845
  %v860 = vld [vmem:[#allocation4] sm:$0xff]
  %v861 = vld [vmem:[#allocation4 + $0x8] sm:$0xff]
  %864 = vrot.lane.b32.xlu0 %v860, 32
  %v865 = vpop.permute.xlu0 %864
  %866 = vrot.lane.b32.xlu0 %v861, 32
  %v867 = vpop.permute.xlu0 %866
  %v870 = vmul.f32 %v855, %v865
  %v871 = vmul.f32 %v857, %v867
  %874 = vrot.lane.b32.xlu0 %v858, 64
  %v875 = vpop.permute.xlu0 %874
  %876 = vrot.lane.b32.xlu0 %v859, 64
  %v877 = vpop.permute.xlu0 %876
  %v880 = vmul.f32 %v855, %v875
  %v881 = vmul.f32 %v857, %v877
  %884 = vrot.lane.b32.xlu0 %v880, 32
  %v885 = vpop.permute.xlu0 %884
  %886 = vrot.lane.b32.xlu0 %v881, 32
  %v887 = vpop.permute.xlu0 %886
  %v890 = vadd.f32 %v870, %v885
  %v891 = vadd.f32 %v871, %v887
  %v892 = vtanh.pop %v890
  %v893 = vtanh.pop %v891
  %896 = vrot.lane.b32.xlu0 %v892, 64
  %v897 = vpop.permute.xlu0 %896
  %898 = vrot.lane.b32.xlu0 %v893, 64
  %v899 = vpop.permute.xlu0 %898
  %v902 = vmul.f32 %v855, %v897
  %v903 = vmul.f32 %v857, %v899
  %906 = vrot.lane.b32.xlu0 %v902, 32
  %v907 = vpop.permute.xlu0 %906
  %908 = vrot.lane.b32.xlu0 %v903, 32
  %v909 = vpop.permute.xlu0 %908
  %912 = vst.msk [vmem:[#allocation3] sm:$0xff] %vm54, %v907
  %913 = vst.msk [vmem:[#allocation3 + $0x8] sm:$0xff] %vm54, %v909
  %916 = vrot.lane.b32.xlu0 %v890, 96
  %v917 = vpop.permute.xlu0 %916
  %918 = vrot.lane.b32.xlu0 %v891, 96
  %v919 = vpop.permute.xlu0 %918
  %922 = vst.msk [vmem:[#allocation4] sm:$0xff] %vm54, %v917
  %923 = vst.msk [vmem:[#allocation4 + $0x8] sm:$0xff] %vm54, %v919
  %v924 = vld [vmem:[#allocation5] sm:$0xff]
  %v925 = vld [vmem:[#allocation5 + $0x8] sm:$0xff]
  %v926 = vadd.f32 %v924, %v907
  %v927 = vadd.f32 %v925, %v909
  %928 = vst.msk [vmem:[#allocation5] sm:$0xff] %vm54, %v926
  %929 = vst.msk [vmem:[#allocation5 + $0x8] sm:$0xff] %vm54, %v927
  %v930 = vld [vmem:[#allocation3] sm:$0xff]
  %v931 = vld [vmem:[#allocation3 + $0x8] sm:$0xff]
  %v932 = vld [vmem:[%s2] sm:$0xff]
  %v933 = vld [vmem:[%s2 + $0x8] sm:$0xff]
  %v934 = vld [vmem:[%s2 + $0x10] sm:$0xff]
  %v935 = vld [vmem:[%s2 + $0x18] sm:$0xff]
  %v936 = vld [vmem:[%s2 + $0x20] sm:$0xff]
  %v937 = vld [vmem:[%s2 + $0x28] sm:$0xff]
  %v938 = vld [vmem:[%s2 + $0x30] sm:$0xff]
  %v939 = vld [vmem:[%s2 + $0x38] sm:$0xff]
  %v941 = vsel %vm54, %v930, 0
  %v944 = vsel %vm54, %v931, 0
  %946 = vmatprep.subr.mxu0 %v933
  %947 = vmatpush1.msra.mxu0 %v932
  %948 = vmatprep.subr.mxu0 %v935
  %949 = vmatpush1.msra.mxu0 %v934
  %950 = vmatprep.subr.mxu0 %v937
  %951 = vmatpush1.msra.mxu0 %v936
  %952 = vmatprep.subr.mxu0 %v939
  %953 = vmatpush1.msra.mxu0 %v938
  %954 = vmatprep.subr.mxu0 0.0
  %955 = vmatpush1.msra.mxu0 0.0
  %956 = vmatprep.subr.mxu0 0.0
  %957 = vmatpush1.msra.mxu0 0.0
  %958 = vmatprep.subr.mxu0 0.0
  %959 = vmatpush1.msra.mxu0 0.0
  %960 = vmatprep.subr.mxu0 0.0
  %961 = vmatpush1.msra.mxu0 0.0
  %962 = vmatprep.subr.mxu0 0.0
  %963 = vmatpush1.msra.mxu0 0.0
  %964 = vmatprep.subr.mxu0 0.0
  %965 = vmatpush1.msra.mxu0 0.0
  %966 = vmatprep.subr.mxu0 0.0
  %967 = vmatpush1.msra.mxu0 0.0
  %968 = vmatprep.subr.mxu0 0.0
  %969 = vmatpush1.msra.mxu0 0.0
  %970 = vmatprep.subr.mxu0 0.0
  %971 = vmatpush1.msra.mxu0 0.0
  %972 = vmatprep.subr.mxu0 0.0
  %973 = vmatpush1.msra.mxu0 0.0
  %974 = vmatprep.subr.mxu0 0.0
  %975 = vmatpush1.msra.mxu0 0.0
  %976 = vmatprep.subr.mxu0 0.0
  %977 = vmatpush1.msra.mxu0 0.0
  %978 = vmatprep.subr.mxu0 0.0
  %979 = vmatpush1.msra.mxu0 0.0
  %980 = vmatprep.subr.mxu0 0.0
  %981 = vmatpush1.msra.mxu0 0.0
  %982 = vmatprep.subr.mxu0 0.0
  %983 = vmatpush1.msra.mxu0 0.0
  %984 = vmatprep.subr.mxu0 0.0
  %985 = vmatpush1.msra.mxu0 0.0
  %986 = vmatprep.subr.mxu0 0.0
  %987 = vmatpush1.msra.mxu0 0.0
  %988 = vmatprep.subr.mxu0 0.0
  %989 = vmatpush1.msra.mxu0 0.0
  %990 = vmatprep.subr.mxu0 0.0
  %991 = vmatpush1.msra.mxu0 0.0
  %992 = vmatprep.subr.mxu0 0.0
  %993 = vmatpush1.msra.mxu0 0.0
  %994 = vmatprep.subr.mxu0 0.0
  %995 = vmatpush1.msra.mxu0 0.0
  %996 = vmatprep.subr.mxu0 0.0
  %997 = vmatpush1.msra.mxu0 0.0
  %998 = vmatprep.subr.mxu0 0.0
  %999 = vmatpush1.msra.mxu0 0.0
  %1000 = vmatprep.subr.mxu0 0.0
  %1001 = vmatpush1.msra.mxu0 0.0
  %1002 = vmatprep.subr.mxu0 0.0
  %1003 = vmatpush1.msra.mxu0 0.0
  %1004 = vmatprep.subr.mxu0 0.0
  %1005 = vmatpush1.msra.mxu0 0.0
  %1006 = vmatprep.subr.mxu0 0.0
  %1007 = vmatpush1.msra.mxu0 0.0
  %1008 = vmatprep.subr.mxu0 0.0
  %1009 = vmatpush1.msra.mxu0 0.0
  %1010 = vmatprep.mubr.f32.mxu0 0.0
  %1011 = vmatmul.mubr.f32.gmra.mrb[0].mxu0 %v941
  %v1012 = vpop.f32.mrb[0].mxu0
  %v1013 = vadd.f32 0.0, %v1012
  %v1014 = vpop.f32.mrb[0].mxu0
  %1015 = vmatprep.mubr.f32.mxu0 0.0
  %1016 = vmatmul.mubr.f32.gmra.mrb[0].mxu0 %v944
  %v1017 = vpop.f32.mrb[0].mxu0
  %v1018 = vpop.f32.mrb[0].mxu0
  %v1019 = vadd.f32 0.0, %v1018
  %1020 = vdwg.mxu0
  %v1021 = vld [vmem:[#allocation2 + $0x40] sm:$0xff]
  %v1022 = vadd.f32 %v1021, %v1013
  %v1023 = vld [vmem:[#allocation2 + $0x38] sm:$0xff]
  %v1024 = vadd.f32 %v1023, %v1019
  %v1025 = vxor.u32 %v1022, 2147483648
  %v1026 = vxor.u32 %v1024, 2147483648
  %v1027 = vmul.f32 %v1025, 1.442695
  %v1028 = vpow.pop %v1027
  %v1029 = vmul.f32 %v1026, 1.442695
  %v1030 = vpow.pop %v1029
  %v1031 = vadd.f32 %v1028, 1.0
  %v1032 = vadd.f32 %v1030, 1.0
  %v1033 = vrcp.pop %v1031
  %v1034 = vmul.f32 1.0, %v1033
  %v1035 = vrcp.pop %v1032
  %v1036 = vmul.f32 1.0, %v1035
  %v1037 = vtanh.pop %v1022
  %v1038 = vtanh.pop %v1024
  %v1039 = vld [vmem:[#allocation4] sm:$0xff]
  %v1040 = vld [vmem:[#allocation4 + $0x8] sm:$0xff]
  %1043 = vrot.lane.b32.xlu0 %v1039, 32
  %v1044 = vpop.permute.xlu0 %1043
  %1045 = vrot.lane.b32.xlu0 %v1040, 32
  %v1046 = vpop.permute.xlu0 %1045
  %v1049 = vmul.f32 %v1034, %v1044
  %v1050 = vmul.f32 %v1036, %v1046
  %1053 = vrot.lane.b32.xlu0 %v1037, 64
  %v1054 = vpop.permute.xlu0 %1053
  %1055 = vrot.lane.b32.xlu0 %v1038, 64
  %v1056 = vpop.permute.xlu0 %1055
  %v1059 = vmul.f32 %v1034, %v1054
  %v1060 = vmul.f32 %v1036, %v1056
  %1063 = vrot.lane.b32.xlu0 %v1059, 32
  %v1064 = vpop.permute.xlu0 %1063
  %1065 = vrot.lane.b32.xlu0 %v1060, 32
  %v1066 = vpop.permute.xlu0 %1065
  %v1069 = vadd.f32 %v1049, %v1064
  %v1070 = vadd.f32 %v1050, %v1066
  %v1071 = vtanh.pop %v1069
  %v1072 = vtanh.pop %v1070
  %1075 = vrot.lane.b32.xlu0 %v1071, 64
  %v1076 = vpop.permute.xlu0 %1075
  %1077 = vrot.lane.b32.xlu0 %v1072, 64
  %v1078 = vpop.permute.xlu0 %1077
  %v1081 = vmul.f32 %v1034, %v1076
  %v1082 = vmul.f32 %v1036, %v1078
  %1085 = vrot.lane.b32.xlu0 %v1081, 32
  %v1086 = vpop.permute.xlu0 %1085
  %1087 = vrot.lane.b32.xlu0 %v1082, 32
  %v1088 = vpop.permute.xlu0 %1087
  %1091 = vst.msk [vmem:[#allocation3] sm:$0xff] %vm54, %v1086
  %1092 = vst.msk [vmem:[#allocation3 + $0x8] sm:$0xff] %vm54, %v1088
  %1095 = vrot.lane.b32.xlu0 %v1069, 96
  %v1096 = vpop.permute.xlu0 %1095
  %1097 = vrot.lane.b32.xlu0 %v1070, 96
  %v1098 = vpop.permute.xlu0 %1097
  %1101 = vst.msk [vmem:[#allocation4] sm:$0xff] %vm54, %v1096
  %1102 = vst.msk [vmem:[#allocation4 + $0x8] sm:$0xff] %vm54, %v1098
  %v1103 = vld [vmem:[#allocation5] sm:$0xff]
  %v1104 = vld [vmem:[#allocation5 + $0x8] sm:$0xff]
  %v1105 = vadd.f32 %v1103, %v1086
  %v1106 = vadd.f32 %v1104, %v1088
  %1107 = vst.msk [vmem:[#allocation5] sm:$0xff] %vm54, %v1105
  %1108 = vst.msk [vmem:[#allocation5 + $0x8] sm:$0xff] %vm54, %v1106
  %v1109 = vld [vmem:[#allocation3] sm:$0xff]
  %v1110 = vld [vmem:[#allocation3 + $0x8] sm:$0xff]
  %v1111 = vld [vmem:[%s2] sm:$0xff]
  %v1112 = vld [vmem:[%s2 + $0x8] sm:$0xff]
  %v1113 = vld [vmem:[%s2 + $0x10] sm:$0xff]
  %v1114 = vld [vmem:[%s2 + $0x18] sm:$0xff]
  %v1115 = vld [vmem:[%s2 + $0x20] sm:$0xff]
  %v1116 = vld [vmem:[%s2 + $0x28] sm:$0xff]
  %v1117 = vld [vmem:[%s2 + $0x30] sm:$0xff]
  %v1118 = vld [vmem:[%s2 + $0x38] sm:$0xff]
  %v1120 = vsel %vm54, %v1109, 0
  %v1123 = vsel %vm54, %v1110, 0
  %1125 = vmatprep.subr.mxu0 %v1112
  %1126 = vmatpush1.msra.mxu0 %v1111
  %1127 = vmatprep.subr.mxu0 %v1114
  %1128 = vmatpush1.msra.mxu0 %v1113
  %1129 = vmatprep.subr.mxu0 %v1116
  %1130 = vmatpush1.msra.mxu0 %v1115
  %1131 = vmatprep.subr.mxu0 %v1118
  %1132 = vmatpush1.msra.mxu0 %v1117
  %1133 = vmatprep.subr.mxu0 0.0
  %1134 = vmatpush1.msra.mxu0 0.0
  %1135 = vmatprep.subr.mxu0 0.0
  %1136 = vmatpush1.msra.mxu0 0.0
  %1137 = vmatprep.subr.mxu0 0.0
  %1138 = vmatpush1.msra.mxu0 0.0
  %1139 = vmatprep.subr.mxu0 0.0
  %1140 = vmatpush1.msra.mxu0 0.0
  %1141 = vmatprep.subr.mxu0 0.0
  %1142 = vmatpush1.msra.mxu0 0.0
  %1143 = vmatprep.subr.mxu0 0.0
  %1144 = vmatpush1.msra.mxu0 0.0
  %1145 = vmatprep.subr.mxu0 0.0
  %1146 = vmatpush1.msra.mxu0 0.0
  %1147 = vmatprep.subr.mxu0 0.0
  %1148 = vmatpush1.msra.mxu0 0.0
  %1149 = vmatprep.subr.mxu0 0.0
  %1150 = vmatpush1.msra.mxu0 0.0
  %1151 = vmatprep.subr.mxu0 0.0
  %1152 = vmatpush1.msra.mxu0 0.0
  %1153 = vmatprep.subr.mxu0 0.0
  %1154 = vmatpush1.msra.mxu0 0.0
  %1155 = vmatprep.subr.mxu0 0.0
  %1156 = vmatpush1.msra.mxu0 0.0
  %1157 = vmatprep.subr.mxu0 0.0
  %1158 = vmatpush1.msra.mxu0 0.0
  %1159 = vmatprep.subr.mxu0 0.0
  %1160 = vmatpush1.msra.mxu0 0.0
  %1161 = vmatprep.subr.mxu0 0.0
  %1162 = vmatpush1.msra.mxu0 0.0
  %1163 = vmatprep.subr.mxu0 0.0
  %1164 = vmatpush1.msra.mxu0 0.0
  %1165 = vmatprep.subr.mxu0 0.0
  %1166 = vmatpush1.msra.mxu0 0.0
  %1167 = vmatprep.subr.mxu0 0.0
  %1168 = vmatpush1.msra.mxu0 0.0
  %1169 = vmatprep.subr.mxu0 0.0
  %1170 = vmatpush1.msra.mxu0 0.0
  %1171 = vmatprep.subr.mxu0 0.0
  %1172 = vmatpush1.msra.mxu0 0.0
  %1173 = vmatprep.subr.mxu0 0.0
  %1174 = vmatpush1.msra.mxu0 0.0
  %1175 = vmatprep.subr.mxu0 0.0
  %1176 = vmatpush1.msra.mxu0 0.0
  %1177 = vmatprep.subr.mxu0 0.0
  %1178 = vmatpush1.msra.mxu0 0.0
  %1179 = vmatprep.subr.mxu0 0.0
  %1180 = vmatpush1.msra.mxu0 0.0
  %1181 = vmatprep.subr.mxu0 0.0
  %1182 = vmatpush1.msra.mxu0 0.0
  %1183 = vmatprep.subr.mxu0 0.0
  %1184 = vmatpush1.msra.mxu0 0.0
  %1185 = vmatprep.subr.mxu0 0.0
  %1186 = vmatpush1.msra.mxu0 0.0
  %1187 = vmatprep.subr.mxu0 0.0
  %1188 = vmatpush1.msra.mxu0 0.0
  %1189 = vmatprep.mubr.f32.mxu0 0.0
  %1190 = vmatmul.mubr.f32.gmra.mrb[0].mxu0 %v1120
  %v1191 = vpop.f32.mrb[0].mxu0
  %v1192 = vadd.f32 0.0, %v1191
  %v1193 = vpop.f32.mrb[0].mxu0
  %1194 = vmatprep.mubr.f32.mxu0 0.0
  %1195 = vmatmul.mubr.f32.gmra.mrb[0].mxu0 %v1123
  %v1196 = vpop.f32.mrb[0].mxu0
  %v1197 = vpop.f32.mrb[0].mxu0
  %v1198 = vadd.f32 0.0, %v1197
  %1199 = vdwg.mxu0
  %v1200 = vld [vmem:[#allocation2 + $0x50] sm:$0xff]
  %v1201 = vadd.f32 %v1200, %v1192
  %v1202 = vld [vmem:[#allocation2 + $0x28] sm:$0xff]
  %v1203 = vadd.f32 %v1202, %v1198
  %v1204 = vxor.u32 %v1201, 2147483648
  %v1205 = vxor.u32 %v1203, 2147483648
  %v1206 = vmul.f32 %v1204, 1.442695
  %v1207 = vpow.pop %v1206
  %v1208 = vmul.f32 %v1205, 1.442695
  %v1209 = vpow.pop %v1208
  %v1210 = vadd.f32 %v1207, 1.0
  %v1211 = vadd.f32 %v1209, 1.0
  %v1212 = vrcp.pop %v1210
  %v1213 = vmul.f32 1.0, %v1212
  %v1214 = vrcp.pop %v1211
  %v1215 = vmul.f32 1.0, %v1214
  %v1216 = vtanh.pop %v1201
  %v1217 = vtanh.pop %v1203
  %v1218 = vld [vmem:[#allocation4] sm:$0xff]
  %v1219 = vld [vmem:[#allocation4 + $0x8] sm:$0xff]
  %1222 = vrot.lane.b32.xlu0 %v1218, 32
  %v1223 = vpop.permute.xlu0 %1222
  %1224 = vrot.lane.b32.xlu0 %v1219, 32
  %v1225 = vpop.permute.xlu0 %1224
  %v1228 = vmul.f32 %v1213, %v1223
  %v1229 = vmul.f32 %v1215, %v1225
  %1232 = vrot.lane.b32.xlu0 %v1216, 64
  %v1233 = vpop.permute.xlu0 %1232
  %1234 = vrot.lane.b32.xlu0 %v1217, 64
  %v1235 = vpop.permute.xlu0 %1234
  %v1238 = vmul.f32 %v1213, %v1233
  %v1239 = vmul.f32 %v1215, %v1235
  %1242 = vrot.lane.b32.xlu0 %v1238, 32
  %v1243 = vpop.permute.xlu0 %1242
  %1244 = vrot.lane.b32.xlu0 %v1239, 32
  %v1245 = vpop.permute.xlu0 %1244
  %v1248 = vadd.f32 %v1228, %v1243
  %v1249 = vadd.f32 %v1229, %v1245
  %v1250 = vtanh.pop %v1248
  %v1251 = vtanh.pop %v1249
  %1254 = vrot.lane.b32.xlu0 %v1250, 64
  %v1255 = vpop.permute.xlu0 %1254
  %1256 = vrot.lane.b32.xlu0 %v1251, 64
  %v1257 = vpop.permute.xlu0 %1256
  %v1260 = vmul.f32 %v1213, %v1255
  %v1261 = vmul.f32 %v1215, %v1257
  %1264 = vrot.lane.b32.xlu0 %v1260, 32
  %v1265 = vpop.permute.xlu0 %1264
  %1266 = vrot.lane.b32.xlu0 %v1261, 32
  %v1267 = vpop.permute.xlu0 %1266
  %1270 = vst.msk [vmem:[#allocation3] sm:$0xff] %vm54, %v1265
  %1271 = vst.msk [vmem:[#allocation3 + $0x8] sm:$0xff] %vm54, %v1267
  %1274 = vrot.lane.b32.xlu0 %v1248, 96
  %v1275 = vpop.permute.xlu0 %1274
  %1276 = vrot.lane.b32.xlu0 %v1249, 96
  %v1277 = vpop.permute.xlu0 %1276
  %1280 = vst.msk [vmem:[#allocation4] sm:$0xff] %vm54, %v1275
  %1281 = vst.msk [vmem:[#allocation4 + $0x8] sm:$0xff] %vm54, %v1277
  %v1282 = vld [vmem:[#allocation5] sm:$0xff]
  %v1283 = vld [vmem:[#allocation5 + $0x8] sm:$0xff]
  %v1284 = vadd.f32 %v1282, %v1265
  %v1285 = vadd.f32 %v1283, %v1267
  %1286 = vst.msk [vmem:[#allocation5] sm:$0xff] %vm54, %v1284
  %1287 = vst.msk [vmem:[#allocation5 + $0x8] sm:$0xff] %vm54, %v1285
  %v1288 = vld [vmem:[#allocation3] sm:$0xff]
  %v1289 = vld [vmem:[#allocation3 + $0x8] sm:$0xff]
  %v1290 = vld [vmem:[%s2] sm:$0xff]
  %v1291 = vld [vmem:[%s2 + $0x8] sm:$0xff]
  %v1292 = vld [vmem:[%s2 + $0x10] sm:$0xff]
  %v1293 = vld [vmem:[%s2 + $0x18] sm:$0xff]
  %v1294 = vld [vmem:[%s2 + $0x20] sm:$0xff]
  %v1295 = vld [vmem:[%s2 + $0x28] sm:$0xff]
  %v1296 = vld [vmem:[%s2 + $0x30] sm:$0xff]
  %v1297 = vld [vmem:[%s2 + $0x38] sm:$0xff]
  %v1299 = vsel %vm54, %v1288, 0
  %v1302 = vsel %vm54, %v1289, 0
  %1304 = vmatprep.subr.mxu0 %v1291
  %1305 = vmatpush1.msra.mxu0 %v1290
  %1306 = vmatprep.subr.mxu0 %v1293
  %1307 = vmatpush1.msra.mxu0 %v1292
  %1308 = vmatprep.subr.mxu0 %v1295
  %1309 = vmatpush1.msra.mxu0 %v1294
  %1310 = vmatprep.subr.mxu0 %v1297
  %1311 = vmatpush1.msra.mxu0 %v1296
  %1312 = vmatprep.subr.mxu0 0.0
  %1313 = vmatpush1.msra.mxu0 0.0
  %1314 = vmatprep.subr.mxu0 0.0
  %1315 = vmatpush1.msra.mxu0 0.0
  %1316 = vmatprep.subr.mxu0 0.0
  %1317 = vmatpush1.msra.mxu0 0.0
  %1318 = vmatprep.subr.mxu0 0.0
  %1319 = vmatpush1.msra.mxu0 0.0
  %1320 = vmatprep.subr.mxu0 0.0
  %1321 = vmatpush1.msra.mxu0 0.0
  %1322 = vmatprep.subr.mxu0 0.0
  %1323 = vmatpush1.msra.mxu0 0.0
  %1324 = vmatprep.subr.mxu0 0.0
  %1325 = vmatpush1.msra.mxu0 0.0
  %1326 = vmatprep.subr.mxu0 0.0
  %1327 = vmatpush1.msra.mxu0 0.0
  %1328 = vmatprep.subr.mxu0 0.0
  %1329 = vmatpush1.msra.mxu0 0.0
  %1330 = vmatprep.subr.mxu0 0.0
  %1331 = vmatpush1.msra.mxu0 0.0
  %1332 = vmatprep.subr.mxu0 0.0
  %1333 = vmatpush1.msra.mxu0 0.0
  %1334 = vmatprep.subr.mxu0 0.0
  %1335 = vmatpush1.msra.mxu0 0.0
  %1336 = vmatprep.subr.mxu0 0.0
  %1337 = vmatpush1.msra.mxu0 0.0
  %1338 = vmatprep.subr.mxu0 0.0
  %1339 = vmatpush1.msra.mxu0 0.0
  %1340 = vmatprep.subr.mxu0 0.0
  %1341 = vmatpush1.msra.mxu0 0.0
  %1342 = vmatprep.subr.mxu0 0.0
  %1343 = vmatpush1.msra.mxu0 0.0
  %1344 = vmatprep.subr.mxu0 0.0
  %1345 = vmatpush1.msra.mxu0 0.0
  %1346 = vmatprep.subr.mxu0 0.0
  %1347 = vmatpush1.msra.mxu0 0.0
  %1348 = vmatprep.subr.mxu0 0.0
  %1349 = vmatpush1.msra.mxu0 0.0
  %1350 = vmatprep.subr.mxu0 0.0
  %1351 = vmatpush1.msra.mxu0 0.0
  %1352 = vmatprep.subr.mxu0 0.0
  %1353 = vmatpush1.msra.mxu0 0.0
  %1354 = vmatprep.subr.mxu0 0.0
  %1355 = vmatpush1.msra.mxu0 0.0
  %1356 = vmatprep.subr.mxu0 0.0
  %1357 = vmatpush1.msra.mxu0 0.0
  %1358 = vmatprep.subr.mxu0 0.0
  %1359 = vmatpush1.msra.mxu0 0.0
  %1360 = vmatprep.subr.mxu0 0.0
  %1361 = vmatpush1.msra.mxu0 0.0
  %1362 = vmatprep.subr.mxu0 0.0
  %1363 = vmatpush1.msra.mxu0 0.0
  %1364 = vmatprep.subr.mxu0 0.0
  %1365 = vmatpush1.msra.mxu0 0.0
  %1366 = vmatprep.subr.mxu0 0.0
  %1367 = vmatpush1.msra.mxu0 0.0
  %1368 = vmatprep.mubr.f32.mxu0 0.0
  %1369 = vmatmul.mubr.f32.gmra.mrb[0].mxu0 %v1299
  %v1370 = vpop.f32.mrb[0].mxu0
  %v1371 = vadd.f32 0.0, %v1370
  %v1372 = vpop.f32.mrb[0].mxu0
  %1373 = vmatprep.mubr.f32.mxu0 0.0
  %1374 = vmatmul.mubr.f32.gmra.mrb[0].mxu0 %v1302
  %v1375 = vpop.f32.mrb[0].mxu0
  %v1376 = vpop.f32.mrb[0].mxu0
  %v1377 = vadd.f32 0.0, %v1376
  %1378 = vdwg.mxu0
  %v1379 = vld [vmem:[#allocation2 + $0x60] sm:$0xff]
  %v1380 = vadd.f32 %v1379, %v1371
  %v1381 = vld [vmem:[#allocation2 + $0x18] sm:$0xff]
  %v1382 = vadd.f32 %v1381, %v1377
  %v1383 = vxor.u32 %v1380, 2147483648
  %v1384 = vxor.u32 %v1382, 2147483648
  %v1385 = vmul.f32 %v1383, 1.442695
  %v1386 = vpow.pop %v1385
  %v1387 = vmul.f32 %v1384, 1.442695
  %v1388 = vpow.pop %v1387
  %v1389 = vadd.f32 %v1386, 1.0
  %v1390 = vadd.f32 %v1388, 1.0
  %v1391 = vrcp.pop %v1389
  %v1392 = vmul.f32 1.0, %v1391
  %v1393 = vrcp.pop %v1390
  %v1394 = vmul.f32 1.0, %v1393
  %v1395 = vtanh.pop %v1380
  %v1396 = vtanh.pop %v1382
  %v1397 = vld [vmem:[#allocation4] sm:$0xff]
  %v1398 = vld [vmem:[#allocation4 + $0x8] sm:$0xff]
  %1401 = vrot.lane.b32.xlu0 %v1397, 32
  %v1402 = vpop.permute.xlu0 %1401
  %1403 = vrot.lane.b32.xlu0 %v1398, 32
  %v1404 = vpop.permute.xlu0 %1403
  %v1407 = vmul.f32 %v1392, %v1402
  %v1408 = vmul.f32 %v1394, %v1404
  %1411 = vrot.lane.b32.xlu0 %v1395, 64
  %v1412 = vpop.permute.xlu0 %1411
  %1413 = vrot.lane.b32.xlu0 %v1396, 64
  %v1414 = vpop.permute.xlu0 %1413
  %v1417 = vmul.f32 %v1392, %v1412
  %v1418 = vmul.f32 %v1394, %v1414
  %1421 = vrot.lane.b32.xlu0 %v1417, 32
  %v1422 = vpop.permute.xlu0 %1421
  %1423 = vrot.lane.b32.xlu0 %v1418, 32
  %v1424 = vpop.permute.xlu0 %1423
  %v1427 = vadd.f32 %v1407, %v1422
  %v1428 = vadd.f32 %v1408, %v1424
  %v1429 = vtanh.pop %v1427
  %v1430 = vtanh.pop %v1428
  %1433 = vrot.lane.b32.xlu0 %v1429, 64
  %v1434 = vpop.permute.xlu0 %1433
  %1435 = vrot.lane.b32.xlu0 %v1430, 64
  %v1436 = vpop.permute.xlu0 %1435
  %v1439 = vmul.f32 %v1392, %v1434
  %v1440 = vmul.f32 %v1394, %v1436
  %1443 = vrot.lane.b32.xlu0 %v1439, 32
  %v1444 = vpop.permute.xlu0 %1443
  %1445 = vrot.lane.b32.xlu0 %v1440, 32
  %v1446 = vpop.permute.xlu0 %1445
  %1449 = vst.msk [vmem:[#allocation3] sm:$0xff] %vm54, %v1444
  %1450 = vst.msk [vmem:[#allocation3 + $0x8] sm:$0xff] %vm54, %v1446
  %1453 = vrot.lane.b32.xlu0 %v1427, 96
  %v1454 = vpop.permute.xlu0 %1453
  %1455 = vrot.lane.b32.xlu0 %v1428, 96
  %v1456 = vpop.permute.xlu0 %1455
  %1459 = vst.msk [vmem:[#allocation4] sm:$0xff] %vm54, %v1454
  %1460 = vst.msk [vmem:[#allocation4 + $0x8] sm:$0xff] %vm54, %v1456
  %v1461 = vld [vmem:[#allocation5] sm:$0xff]
  %v1462 = vld [vmem:[#allocation5 + $0x8] sm:$0xff]
  %v1463 = vadd.f32 %v1461, %v1444
  %v1464 = vadd.f32 %v1462, %v1446
  %1465 = vst.msk [vmem:[#allocation5] sm:$0xff] %vm54, %v1463
  %1466 = vst.msk [vmem:[#allocation5 + $0x8] sm:$0xff] %vm54, %v1464
  %v1467 = vld [vmem:[#allocation3] sm:$0xff]
  %v1468 = vld [vmem:[#allocation3 + $0x8] sm:$0xff]
  %v1469 = vld [vmem:[%s2] sm:$0xff]
  %v1470 = vld [vmem:[%s2 + $0x8] sm:$0xff]
  %v1471 = vld [vmem:[%s2 + $0x10] sm:$0xff]
  %v1472 = vld [vmem:[%s2 + $0x18] sm:$0xff]
  %v1473 = vld [vmem:[%s2 + $0x20] sm:$0xff]
  %v1474 = vld [vmem:[%s2 + $0x28] sm:$0xff]
  %v1475 = vld [vmem:[%s2 + $0x30] sm:$0xff]
  %v1476 = vld [vmem:[%s2 + $0x38] sm:$0xff]
  %v1478 = vsel %vm54, %v1467, 0
  %v1481 = vsel %vm54, %v1468, 0
  %1483 = vmatprep.subr.mxu0 %v1470
  %1484 = vmatpush1.msra.mxu0 %v1469
  %1485 = vmatprep.subr.mxu0 %v1472
  %1486 = vmatpush1.msra.mxu0 %v1471
  %1487 = vmatprep.subr.mxu0 %v1474
  %1488 = vmatpush1.msra.mxu0 %v1473
  %1489 = vmatprep.subr.mxu0 %v1476
  %1490 = vmatpush1.msra.mxu0 %v1475
  %1491 = vmatprep.subr.mxu0 0.0
  %1492 = vmatpush1.msra.mxu0 0.0
  %1493 = vmatprep.subr.mxu0 0.0
  %1494 = vmatpush1.msra.mxu0 0.0
  %1495 = vmatprep.subr.mxu0 0.0
  %1496 = vmatpush1.msra.mxu0 0.0
  %1497 = vmatprep.subr.mxu0 0.0
  %1498 = vmatpush1.msra.mxu0 0.0
  %1499 = vmatprep.subr.mxu0 0.0
  %1500 = vmatpush1.msra.mxu0 0.0
  %1501 = vmatprep.subr.mxu0 0.0
  %1502 = vmatpush1.msra.mxu0 0.0
  %1503 = vmatprep.subr.mxu0 0.0
  %1504 = vmatpush1.msra.mxu0 0.0
  %1505 = vmatprep.subr.mxu0 0.0
  %1506 = vmatpush1.msra.mxu0 0.0
  %1507 = vmatprep.subr.mxu0 0.0
  %1508 = vmatpush1.msra.mxu0 0.0
  %1509 = vmatprep.subr.mxu0 0.0
  %1510 = vmatpush1.msra.mxu0 0.0
  %1511 = vmatprep.subr.mxu0 0.0
  %1512 = vmatpush1.msra.mxu0 0.0
  %1513 = vmatprep.subr.mxu0 0.0
  %1514 = vmatpush1.msra.mxu0 0.0
  %1515 = vmatprep.subr.mxu0 0.0
  %1516 = vmatpush1.msra.mxu0 0.0
  %1517 = vmatprep.subr.mxu0 0.0
  %1518 = vmatpush1.msra.mxu0 0.0
  %1519 = vmatprep.subr.mxu0 0.0
  %1520 = vmatpush1.msra.mxu0 0.0
  %1521 = vmatprep.subr.mxu0 0.0
  %1522 = vmatpush1.msra.mxu0 0.0
  %1523 = vmatprep.subr.mxu0 0.0
  %1524 = vmatpush1.msra.mxu0 0.0
  %1525 = vmatprep.subr.mxu0 0.0
  %1526 = vmatpush1.msra.mxu0 0.0
  %1527 = vmatprep.subr.mxu0 0.0
  %1528 = vmatpush1.msra.mxu0 0.0
  %1529 = vmatprep.subr.mxu0 0.0
  %1530 = vmatpush1.msra.mxu0 0.0
  %1531 = vmatprep.subr.mxu0 0.0
  %1532 = vmatpush1.msra.mxu0 0.0
  %1533 = vmatprep.subr.mxu0 0.0
  %1534 = vmatpush1.msra.mxu0 0.0
  %1535 = vmatprep.subr.mxu0 0.0
  %1536 = vmatpush1.msra.mxu0 0.0
  %1537 = vmatprep.subr.mxu0 0.0
  %1538 = vmatpush1.msra.mxu0 0.0
  %1539 = vmatprep.subr.mxu0 0.0
  %1540 = vmatpush1.msra.mxu0 0.0
  %1541 = vmatprep.subr.mxu0 0.0
  %1542 = vmatpush1.msra.mxu0 0.0
  %1543 = vmatprep.subr.mxu0 0.0
  %1544 = vmatpush1.msra.mxu0 0.0
  %1545 = vmatprep.subr.mxu0 0.0
  %1546 = vmatpush1.msra.mxu0 0.0
  %1547 = vmatprep.mubr.f32.mxu0 0.0
  %1548 = vmatmul.mubr.f32.gmra.mrb[0].mxu0 %v1478
  %v1549 = vpop.f32.mrb[0].mxu0
  %v1550 = vadd.f32 0.0, %v1549
  %v1551 = vpop.f32.mrb[0].mxu0
  %1552 = vmatprep.mubr.f32.mxu0 0.0
  %1553 = vmatmul.mubr.f32.gmra.mrb[0].mxu0 %v1481
  %v1554 = vpop.f32.mrb[0].mxu0
  %v1555 = vpop.f32.mrb[0].mxu0
  %v1556 = vadd.f32 0.0, %v1555
  %1557 = vdwg.mxu0
  %v1558 = vld [vmem:[#allocation2 + $0x70] sm:$0xff]
  %v1559 = vadd.f32 %v1558, %v1550
  %v1560 = vld [vmem:[#allocation2 + $0x8] sm:$0xff]
  %v1561 = vadd.f32 %v1560, %v1556
  %v1562 = vxor.u32 %v1559, 2147483648
  %v1563 = vxor.u32 %v1561, 2147483648
  %v1564 = vmul.f32 %v1562, 1.442695
  %v1565 = vpow.pop %v1564
  %v1566 = vmul.f32 %v1563, 1.442695
  %v1567 = vpow.pop %v1566
  %v1568 = vadd.f32 %v1565, 1.0
  %v1569 = vadd.f32 %v1567, 1.0
  %v1570 = vrcp.pop %v1568
  %v1571 = vmul.f32 1.0, %v1570
  %v1572 = vrcp.pop %v1569
  %v1573 = vmul.f32 1.0, %v1572
  %v1574 = vtanh.pop %v1559
  %v1575 = vtanh.pop %v1561
  %v1576 = vld [vmem:[#allocation4] sm:$0xff]
  %v1577 = vld [vmem:[#allocation4 + $0x8] sm:$0xff]
  %1580 = vrot.lane.b32.xlu0 %v1576, 32
  %v1581 = vpop.permute.xlu0 %1580
  %1582 = vrot.lane.b32.xlu0 %v1577, 32
  %v1583 = vpop.permute.xlu0 %1582
  %v1586 = vmul.f32 %v1571, %v1581
  %v1587 = vmul.f32 %v1573, %v1583
  %1590 = vrot.lane.b32.xlu0 %v1574, 64
  %v1591 = vpop.permute.xlu0 %1590
  %1592 = vrot.lane.b32.xlu0 %v1575, 64
  %v1593 = vpop.permute.xlu0 %1592
  %v1596 = vmul.f32 %v1571, %v1591
  %v1597 = vmul.f32 %v1573, %v1593
  %1600 = vrot.lane.b32.xlu0 %v1596, 32
  %v1601 = vpop.permute.xlu0 %1600
  %1602 = vrot.lane.b32.xlu0 %v1597, 32
  %v1603 = vpop.permute.xlu0 %1602
  %v1606 = vadd.f32 %v1586, %v1601
  %v1607 = vadd.f32 %v1587, %v1603
  %v1608 = vtanh.pop %v1606
  %v1609 = vtanh.pop %v1607
  %1612 = vrot.lane.b32.xlu0 %v1608, 64
  %v1613 = vpop.permute.xlu0 %1612
  %1614 = vrot.lane.b32.xlu0 %v1609, 64
  %v1615 = vpop.permute.xlu0 %1614
  %v1618 = vmul.f32 %v1571, %v1613
  %v1619 = vmul.f32 %v1573, %v1615
  %1622 = vrot.lane.b32.xlu0 %v1618, 32
  %v1623 = vpop.permute.xlu0 %1622
  %1624 = vrot.lane.b32.xlu0 %v1619, 32
  %v1625 = vpop.permute.xlu0 %1624
  %1628 = vst.msk [vmem:[#allocation3] sm:$0xff] %vm54, %v1623
  %1629 = vst.msk [vmem:[#allocation3 + $0x8] sm:$0xff] %vm54, %v1625
  %1632 = vrot.lane.b32.xlu0 %v1606, 96
  %v1633 = vpop.permute.xlu0 %1632
  %1634 = vrot.lane.b32.xlu0 %v1607, 96
  %v1635 = vpop.permute.xlu0 %1634
  %1638 = vst.msk [vmem:[#allocation4] sm:$0xff] %vm54, %v1633
  %1639 = vst.msk [vmem:[#allocation4 + $0x8] sm:$0xff] %vm54, %v1635
  %v1640 = vld [vmem:[#allocation5] sm:$0xff]
  %v1641 = vld [vmem:[#allocation5 + $0x8] sm:$0xff]
  %v1642 = vadd.f32 %v1640, %v1623
  %v1643 = vadd.f32 %v1641, %v1625
  %1644 = vst.msk [vmem:[#allocation5] sm:$0xff] %vm54, %v1642
  %1645 = vst.msk [vmem:[#allocation5 + $0x8] sm:$0xff] %vm54, %v1643
  %v1646 = vld [vmem:[#allocation5] sm:$0xff]
  %v1647 = vld [vmem:[#allocation5 + $0x8] sm:$0xff]
  %1649 = vrot.lane.b32.xlu0 %v1647, 32
  %v1650 = vpop.permute.xlu0 %1649
  %v1652 = vsel %vm54, %v1646, %v1650
  %v1653 = vmul.f32 %v1652, 0.125
  %vm1654 = vcmask 523264
  %1655 = vst.msk [vmem:[%s6] sm:$0xff] %vm1654, %v1653
  %v1656 = vld [vmem:[%s4] sm:$0x3]
  %v1657 = vadd.f32 %v1653, %v1656
  %v1659 = vrot.slane %v1653, 2
  %v1661 = vsub.f32 %v1657, %v1659
  %v1662 = vld [vmem:[%s5] sm:$0x3]
  %v1664 = vrot.slane %v1662, 4
  %v1666 = vadd.f32 %v1653, %v1664
  %v1667 = vsub.f32 %v1666, %v1659
  %v1668 = vmul.f32 %v1661, %v1661
  %vm1669 = vcmask 517120
  %v1670 = vsel %vm1669, %v1668, 0.0
  %1671 = vadd.xlane.f32.xlu0 %v1670
  %v1672 = vpop.xlane.xlu0 %1671
  %vm1673 = vcmask 1024
  %1674 = vst.msk [vmem:[%s7] sm:$0x3] %vm1673, %v1672
  %v1675 = vmul.f32 %v1667, %v1667
  %vm1676 = vcmask 521220
  %v1677 = vsel %vm1676, %v1675, 0.0
  %1678 = vadd.xlane.f32.xlu0 %v1677
  %v1679 = vpop.xlane.xlu0 %1678
  %vm1680 = vcmask 5124
  %1681 = vst.msk [vmem:[%s8 - $0x4] sm:$0x30] %vm1680, %v1679
  // Predicated region
  $region26: #{transe_forward.1} parent=0 // pred_check
    _
  $region27: #{transe_forward.1} parent=0 // pred_check_branch
    %1683 = sbr.rel (0) target = $region29
  $region28: #{transe_forward.1} parent=0 // pred_region
    _
  $region29: #{transe_forward.1} parent=0 // pred_fallthru
    _
  // Predicated region
  $region30: #{transe_forward.1} parent=0 // pred_check
    _
  $region31: #{transe_forward.1} parent=0 // pred_check_branch
    %1685 = sbr.rel (0) target = $region33
  $region32: #{transe_forward.1} parent=0 // pred_region
    _
  $region33: #{transe_forward.1} parent=0 // pred_fallthru
    _
  // Predicated region
  $region34: #{transe_forward.1} parent=0 // pred_check
    _
  $region35: #{transe_forward.1} parent=0 // pred_check_branch
    %1687 = sbr.rel (0) target = $region37
  $region36: #{transe_forward.1} parent=0 // pred_region
    _
  $region37: #{transe_forward.1} parent=0 // pred_fallthru
    _
  // Predicated region
  $region38: #{transe_forward.1} parent=0 // pred_check
    _
  $region39: #{transe_forward.1} parent=0 // pred_check_branch
    %1689 = sbr.rel (0) target = $region41
  $region40: #{transe_forward.1} parent=0 // pred_region
    _
  $region41: #{transe_forward.1} parent=0 // pred_fallthru
    _
  // Predicated region
  $region42: #{transe_forward.1} parent=0 // pred_check
    _
  $region43: #{transe_forward.1} parent=0 // pred_check_branch
    %1691 = sbr.rel (0) target = $region45
  $region44: #{transe_forward.1} parent=0 // pred_region
    _
  $region45: #{transe_forward.1} parent=0 // pred_fallthru
    _
  // Predicated region
  $region46: #{transe_forward.1} parent=0 // pred_check
    _
  $region47: #{transe_forward.1} parent=0 // pred_check_branch
    %1693 = sbr.rel (0) target = $region49
  $region48: #{transe_forward.1} parent=0 // pred_region
    _
  $region49: #{transe_forward.1} parent=0 // pred_fallthru
    _

</llo_original>
